<compile_context>
chip_gen: v7x
topology: tpu7x:2x2x1
jax: 0.10.0
libtpu: 0.0.40
codegen_flags: <defaults>
</compile_context>

<pallas_src>
import functools
import math

import jax
import jax.numpy as jnp
from jax import lax
from jax.experimental import pallas as pl
from jax.experimental.pallas import tpu as pltpu


# ---------------------------------------------------------------------------
# Fused kernel: projections + multi-head attention + output projection
# ---------------------------------------------------------------------------
def _fused_mha_kernel(q_ref, k_ref, v_ref, wq_ref, wk_ref, wv_ref, wo_ref,
                      o_ref, *, num_heads, batch_block, q_len, kv_len,
                      mxu_dtype):
    H = wq_ref.shape[1]
    Dh = H // num_heads
    inv_sqrt_d = jnp.float32(1.0 / math.sqrt(Dh))

    # Weights resident in VMEM for the whole chunk; operand-only cast for MXU.
    wq = wq_ref[...].astype(mxu_dtype)
    wk = wk_ref[...].astype(mxu_dtype)
    wv = wv_ref[...].astype(mxu_dtype)
    wo = wo_ref[...].astype(mxu_dtype)

    xq = q_ref[...].astype(mxu_dtype)          # (bb*Lq, Dq)
    xk = k_ref[...].astype(mxu_dtype)          # (bb*Lk, Dk)
    xv = v_ref[...].astype(mxu_dtype)          # (bb*Lk, Dv)

    # Batched input projections over the whole chunk: one MXU pass each.
    # 1/sqrt(Dh) folded into q once, before the QK matmul; f32 accumulation.
    q = (jnp.dot(xq, wq, preferred_element_type=jnp.float32)
         * inv_sqrt_d).astype(mxu_dtype)                       # (bb*Lq, H)
    k = jnp.dot(xk, wk, preferred_element_type=jnp.float32).astype(mxu_dtype)
    v = jnp.dot(xv, wv, preferred_element_type=jnp.float32).astype(mxu_dtype)

    # Per-batch, per-head attention (static unroll: chunk and head counts are
    # small). Per-head contexts are concatenated into a (Lq, H) slab in vregs
    # so W_o is applied once with a full K=H contraction below.
    ctx_rows = []
    for b in range(batch_block):
        qb = q[b * q_len:(b + 1) * q_len]
        kb = k[b * kv_len:(b + 1) * kv_len]
        vb = v[b * kv_len:(b + 1) * kv_len]
        heads = []
        for h in range(num_heads):
            lo = h * Dh
            qh = qb[:, lo:lo + Dh]             # (Lq, Dh)
            kh = kb[:, lo:lo + Dh]             # (Lk, Dh)
            vh = vb[:, lo:lo + Dh]             # (Lk, Dh)

            # q_h @ k_h^T without materializing a K transpose.
            scores = lax.dot_general(
                qh, kh, (((1,), (1,)), ((), ())),
                preferred_element_type=jnp.float32)            # (Lq, Lk) f32

            # Numerically stable softmax over the key axis, all in f32.
            m = jnp.max(scores, axis=-1, keepdims=True)
            e = jnp.exp(scores - m)
            s = jnp.sum(e, axis=-1, keepdims=True)
            # EUP reciprocal (separate issue slot). Use approx=False / exact
            # divide if bit-tighter parity with the f32 module is required.
            p = e * pl.reciprocal(s, approx=True)

            heads.append(jnp.dot(p.astype(mxu_dtype), vh,
                                 preferred_element_type=jnp.float32))
        ctx_rows.append(jnp.concatenate(heads, axis=-1))        # (Lq, H)

    ctx = jnp.concatenate(ctx_rows, axis=0).astype(mxu_dtype)   # (bb*Lq, H)

    # Single output projection for the whole chunk (one K=H MXU matmul),
    # stored as one contiguous slab.
    o_ref[...] = jnp.dot(ctx, wo,
                         preferred_element_type=jnp.float32).astype(o_ref.dtype)


# ---------------------------------------------------------------------------
# Wrapper
# ---------------------------------------------------------------------------
def multi_head_attention(queries, keys, values, params, num_heads, *,
                         batch_block=None, mxu_dtype=jnp.bfloat16):
    """Pallas implementation of MultiHeadAttention.forward (eval mode).

    batch_block: batches per grid step. Default = B (grid collapsed to one
      step; best on single-TC v5e/v6e). On v7x with larger B, set e.g. B//2 so
      both TensorCores get a chunk.
    mxu_dtype: operand dtype fed to the MXU (accumulation is always f32).
    """
    Wq, Wk, Wv, Wo = params
    B, Lq, Dq = queries.shape
    _, Lk, Dk = keys.shape
    Dv = values.shape[2]
    H = Wq.shape[1]
    assert H % num_heads == 0

    if batch_block is None:
        batch_block = B
    assert B % batch_block == 0
    num_chunks = B // batch_block

    # Flatten batch into rows so each chunk's projections are one big matmul
    # and the kernel reads/writes lane-dense 2-D slabs.
    q2 = queries.reshape(B * Lq, Dq)
    k2 = keys.reshape(B * Lk, Dk)
    v2 = values.reshape(B * Lk, Dv)

    kernel = functools.partial(
        _fused_mha_kernel, num_heads=num_heads, batch_block=batch_block,
        q_len=Lq, kv_len=Lk, mxu_dtype=mxu_dtype)

    out2 = pl.pallas_call(
        kernel,
        out_shape=jax.ShapeDtypeStruct((B * Lq, H), queries.dtype),
        grid=(num_chunks,),
        in_specs=[
            pl.BlockSpec((batch_block * Lq, Dq), lambda i: (i, 0)),  # queries
            pl.BlockSpec((batch_block * Lk, Dk), lambda i: (i, 0)),  # keys
            pl.BlockSpec((batch_block * Lk, Dv), lambda i: (i, 0)),  # values
            pl.BlockSpec((Dq, H), lambda i: (0, 0)),                 # Wq
            pl.BlockSpec((Dk, H), lambda i: (0, 0)),                 # Wk
            pl.BlockSpec((Dv, H), lambda i: (0, 0)),                 # Wv
            pl.BlockSpec((H, H), lambda i: (0, 0)),                  # Wo
        ],
        out_specs=pl.BlockSpec((batch_block * Lq, H), lambda i: (i, 0)),
        compiler_params=pltpu.CompilerParams(
            dimension_semantics=("parallel",)),
    )(q2, k2, v2, Wq, Wk, Wv, Wo)

    return out2.reshape(B, Lq, H)


# ---------------------------------------------------------------------------
# Pure-JAX reference (for sanity check)
# ---------------------------------------------------------------------------
def reference_mha(queries, keys, values, params, num_heads):
    Wq, Wk, Wv, Wo = params
    q, k, v = queries @ Wq, keys @ Wk, values @ Wv
    B, Lq, H = q.shape
    Lk = k.shape[1]
    Dh = H // num_heads

    def split(x, L):
        return (x.reshape(B, L, num_heads, Dh)
                 .transpose(0, 2, 1, 3)
                 .reshape(B * num_heads, L, Dh))

    qh, kh, vh = split(q, Lq), split(k, Lk), split(v, Lk)
    scores = jnp.einsum("bqd,bkd->bqk", qh, kh) / math.sqrt(Dh)
    p = jax.nn.softmax(scores, axis=-1)
    o = jnp.einsum("bqk,bkd->bqd", p, vh)
    o = o.reshape(B, num_heads, Lq, Dh).transpose(0, 2, 1, 3).reshape(B, Lq, H)
    return o @ Wo


# ---------------------------------------------------------------------------
# Main
# ---------------------------------------------------------------------------
if __name__ == "__main__":
    key_size = query_size = value_size = 16
    num_hiddens = 32
    num_heads = 4
    B, Lq, Lk = 2, 8, 8

    root = jax.random.PRNGKey(0)
    kq, kk, kv, ko, kxq, kxk, kxv = jax.random.split(root, 7)

    scale = 0.1
    Wq = scale * jax.random.normal(kq, (query_size, num_hiddens), jnp.float32)
    Wk = scale * jax.random.normal(kk, (key_size, num_hiddens), jnp.float32)
    Wv = scale * jax.random.normal(kv, (value_size, num_hiddens), jnp.float32)
    Wo = scale * jax.random.normal(ko, (num_hiddens, num_hiddens), jnp.float32)
    params = (Wq, Wk, Wv, Wo)

    queries = jax.random.normal(kxq, (B, Lq, query_size), jnp.float32)
    keys = jax.random.normal(kxk, (B, Lk, key_size), jnp.float32)
    values = jax.random.normal(kxv, (B, Lk, value_size), jnp.float32)

    out = multi_head_attention(queries, keys, values, params, num_heads)
    out = jax.block_until_ready(out)

    ref = reference_mha(queries, keys, values, params, num_heads)
    assert out.shape == (B, Lq, num_hiddens), out.shape
    max_err = float(jnp.max(jnp.abs(out - ref)))
    # Tolerance accounts for bf16 MXU operands (f32 accumulation) and the
    # approx softmax reciprocal; pass mxu_dtype=jnp.float32 for tighter parity.
    assert jnp.allclose(out, ref, rtol=1e-2, atol=1e-2), max_err

    print("KERNEL_OK")
</pallas_src>

<mosaic_0001>
module attributes {stable_mosaic.version = 11 : i64} {
  func.func @_fused_mha_kernel(%arg0: i32, %arg1: memref<16x16xf32, #tpu.memory_space<vmem>>, %arg2: memref<16x16xf32, #tpu.memory_space<vmem>>, %arg3: memref<16x16xf32, #tpu.memory_space<vmem>>, %arg4: memref<16x32xf32, #tpu.memory_space<vmem>>, %arg5: memref<16x32xf32, #tpu.memory_space<vmem>>, %arg6: memref<16x32xf32, #tpu.memory_space<vmem>>, %arg7: memref<32x32xf32, #tpu.memory_space<vmem>>, %arg8: memref<16x32xf32, #tpu.memory_space<vmem>>) attributes {dimension_semantics = [#tpu.dimension_semantics<parallel>], iteration_bounds = array<i64: 1>, scalar_prefetch = 0 : i64, scratch_operands = 0 : i64, tpu.core_type = #tpu.core_type<tc>, window_params = [{transform_indices = @transform_0, window_bounds = array<i64: 16, 16>}, {transform_indices = @transform_1, window_bounds = array<i64: 16, 16>}, {transform_indices = @transform_2, window_bounds = array<i64: 16, 16>}, {pipeline_mode = #tpu.pipeline_mode<synchronous>, transform_indices = @transform_3, window_bounds = array<i64: 16, 32>}, {pipeline_mode = #tpu.pipeline_mode<synchronous>, transform_indices = @transform_4, window_bounds = array<i64: 16, 32>}, {pipeline_mode = #tpu.pipeline_mode<synchronous>, transform_indices = @transform_5, window_bounds = array<i64: 16, 32>}, {pipeline_mode = #tpu.pipeline_mode<synchronous>, transform_indices = @transform_6, window_bounds = array<i64: 32, 32>}, {transform_indices = @transform_7, window_bounds = array<i64: 16, 32>}]} {
    %c0 = arith.constant 0 : index
    %c0_0 = arith.constant 0 : index
    %0 = vector.load %arg4[%c0, %c0_0] : memref<16x32xf32, #tpu.memory_space<vmem>>, vector<16x32xf32>
    %1 = arith.truncf %0 : vector<16x32xf32> to vector<16x32xbf16>
    %c0_1 = arith.constant 0 : index
    %c0_2 = arith.constant 0 : index
    %2 = vector.load %arg5[%c0_1, %c0_2] : memref<16x32xf32, #tpu.memory_space<vmem>>, vector<16x32xf32>
    %3 = arith.truncf %2 : vector<16x32xf32> to vector<16x32xbf16>
    %c0_3 = arith.constant 0 : index
    %c0_4 = arith.constant 0 : index
    %4 = vector.load %arg6[%c0_3, %c0_4] : memref<16x32xf32, #tpu.memory_space<vmem>>, vector<16x32xf32>
    %5 = arith.truncf %4 : vector<16x32xf32> to vector<16x32xbf16>
    %c0_5 = arith.constant 0 : index
    %c0_6 = arith.constant 0 : index
    %6 = vector.load %arg7[%c0_5, %c0_6] : memref<32x32xf32, #tpu.memory_space<vmem>>, vector<32x32xf32>
    %7 = arith.truncf %6 : vector<32x32xf32> to vector<32x32xbf16>
    %c0_7 = arith.constant 0 : index
    %c0_8 = arith.constant 0 : index
    %8 = vector.load %arg1[%c0_7, %c0_8] : memref<16x16xf32, #tpu.memory_space<vmem>>, vector<16x16xf32>
    %9 = arith.truncf %8 : vector<16x16xf32> to vector<16x16xbf16>
    %c0_9 = arith.constant 0 : index
    %c0_10 = arith.constant 0 : index
    %10 = vector.load %arg2[%c0_9, %c0_10] : memref<16x16xf32, #tpu.memory_space<vmem>>, vector<16x16xf32>
    %11 = arith.truncf %10 : vector<16x16xf32> to vector<16x16xbf16>
    %c0_11 = arith.constant 0 : index
    %c0_12 = arith.constant 0 : index
    %12 = vector.load %arg3[%c0_11, %c0_12] : memref<16x16xf32, #tpu.memory_space<vmem>>, vector<16x16xf32>
    %13 = arith.truncf %12 : vector<16x16xf32> to vector<16x16xbf16>
    %cst = arith.constant dense<0.000000e+00> : vector<16x32xf32>
    %14 = tpu.matmul %9, %1, %cst {dimension_numbers = #tpu.dot_dimension_numbers<[1], [0], [0], [1], [0, 0, 1, 1], [], []>} : vector<16x16xbf16>, vector<16x32xbf16>, vector<16x32xf32> -> vector<16x32xf32>
    %cst_13 = arith.constant 0.353553385 : f32
    %15 = vector.broadcast %cst_13 : f32 to vector<16x32xf32>
    %16 = arith.mulf %14, %15 : vector<16x32xf32>
    %17 = arith.truncf %16 : vector<16x32xf32> to vector<16x32xbf16>
    %cst_14 = arith.constant dense<0.000000e+00> : vector<16x32xf32>
    %18 = tpu.matmul %11, %3, %cst_14 {dimension_numbers = #tpu.dot_dimension_numbers<[1], [0], [0], [1], [0, 0, 1, 1], [], []>} : vector<16x16xbf16>, vector<16x32xbf16>, vector<16x32xf32> -> vector<16x32xf32>
    %19 = arith.truncf %18 : vector<16x32xf32> to vector<16x32xbf16>
    %cst_15 = arith.constant dense<0.000000e+00> : vector<16x32xf32>
    %20 = tpu.matmul %13, %5, %cst_15 {dimension_numbers = #tpu.dot_dimension_numbers<[1], [0], [0], [1], [0, 0, 1, 1], [], []>} : vector<16x16xbf16>, vector<16x32xbf16>, vector<16x32xf32> -> vector<16x32xf32>
    %21 = arith.truncf %20 : vector<16x32xf32> to vector<16x32xbf16>
    %22 = vector.extract_strided_slice %17 {offsets = [0, 0], sizes = [8, 32], strides = [1, 1]} : vector<16x32xbf16> to vector<8x32xbf16>
    %23 = vector.extract_strided_slice %19 {offsets = [0, 0], sizes = [8, 32], strides = [1, 1]} : vector<16x32xbf16> to vector<8x32xbf16>
    %24 = vector.extract_strided_slice %21 {offsets = [0, 0], sizes = [8, 32], strides = [1, 1]} : vector<16x32xbf16> to vector<8x32xbf16>
    %25 = vector.extract_strided_slice %22 {offsets = [0, 0], sizes = [8, 8], strides = [1, 1]} : vector<8x32xbf16> to vector<8x8xbf16>
    %26 = vector.extract_strided_slice %23 {offsets = [0, 0], sizes = [8, 8], strides = [1, 1]} : vector<8x32xbf16> to vector<8x8xbf16>
    %27 = vector.extract_strided_slice %24 {offsets = [0, 0], sizes = [8, 8], strides = [1, 1]} : vector<8x32xbf16> to vector<8x8xbf16>
    %cst_16 = arith.constant dense<0.000000e+00> : vector<8x8xf32>
    %28 = tpu.matmul %25, %26, %cst_16 {dimension_numbers = #tpu.dot_dimension_numbers<[1], [1], [0], [0], [0, 0, 1, 0], [], []>} : vector<8x8xbf16>, vector<8x8xbf16>, vector<8x8xf32> -> vector<8x8xf32>
    %cst_17 = arith.constant dense<0xFF800000> : vector<8xf32>
    %29 = vector.multi_reduction <maximumf>, %28, %cst_17 [1] : vector<8x8xf32> to vector<8xf32>
    %30 = vector.shape_cast %29 : vector<8xf32> to vector<8x1xf32>
    %31 = vector.broadcast %30 : vector<8x1xf32> to vector<8x8xf32>
    %32 = arith.subf %28, %31 : vector<8x8xf32>
    %33 = math.exp %32 : vector<8x8xf32>
    %cst_18 = arith.constant dense<0.000000e+00> : vector<8xf32>
    %34 = vector.multi_reduction <add>, %33, %cst_18 [1] : vector<8x8xf32> to vector<8xf32>
    %35 = vector.shape_cast %34 : vector<8xf32> to vector<8x1xf32>
    %36 = tpu.reciprocal %35 {approx = true} : vector<8x1xf32> -> vector<8x1xf32>
    %37 = vector.broadcast %36 : vector<8x1xf32> to vector<8x8xf32>
    %38 = arith.mulf %33, %37 : vector<8x8xf32>
    %39 = arith.truncf %38 : vector<8x8xf32> to vector<8x8xbf16>
    %cst_19 = arith.constant dense<0.000000e+00> : vector<8x8xf32>
    %40 = tpu.matmul %39, %27, %cst_19 {dimension_numbers = #tpu.dot_dimension_numbers<[1], [0], [0], [1], [0, 0, 1, 1], [], []>} : vector<8x8xbf16>, vector<8x8xbf16>, vector<8x8xf32> -> vector<8x8xf32>
    %41 = vector.extract_strided_slice %22 {offsets = [0, 8], sizes = [8, 8], strides = [1, 1]} : vector<8x32xbf16> to vector<8x8xbf16>
    %42 = vector.extract_strided_slice %23 {offsets = [0, 8], sizes = [8, 8], strides = [1, 1]} : vector<8x32xbf16> to vector<8x8xbf16>
    %43 = vector.extract_strided_slice %24 {offsets = [0, 8], sizes = [8, 8], strides = [1, 1]} : vector<8x32xbf16> to vector<8x8xbf16>
    %cst_20 = arith.constant dense<0.000000e+00> : vector<8x8xf32>
    %44 = tpu.matmul %41, %42, %cst_20 {dimension_numbers = #tpu.dot_dimension_numbers<[1], [1], [0], [0], [0, 0, 1, 0], [], []>} : vector<8x8xbf16>, vector<8x8xbf16>, vector<8x8xf32> -> vector<8x8xf32>
    %cst_21 = arith.constant dense<0xFF800000> : vector<8xf32>
    %45 = vector.multi_reduction <maximumf>, %44, %cst_21 [1] : vector<8x8xf32> to vector<8xf32>
    %46 = vector.shape_cast %45 : vector<8xf32> to vector<8x1xf32>
    %47 = vector.broadcast %46 : vector<8x1xf32> to vector<8x8xf32>
    %48 = arith.subf %44, %47 : vector<8x8xf32>
    %49 = math.exp %48 : vector<8x8xf32>
    %cst_22 = arith.constant dense<0.000000e+00> : vector<8xf32>
    %50 = vector.multi_reduction <add>, %49, %cst_22 [1] : vector<8x8xf32> to vector<8xf32>
    %51 = vector.shape_cast %50 : vector<8xf32> to vector<8x1xf32>
    %52 = tpu.reciprocal %51 {approx = true} : vector<8x1xf32> -> vector<8x1xf32>
    %53 = vector.broadcast %52 : vector<8x1xf32> to vector<8x8xf32>
    %54 = arith.mulf %49, %53 : vector<8x8xf32>
    %55 = arith.truncf %54 : vector<8x8xf32> to vector<8x8xbf16>
    %cst_23 = arith.constant dense<0.000000e+00> : vector<8x8xf32>
    %56 = tpu.matmul %55, %43, %cst_23 {dimension_numbers = #tpu.dot_dimension_numbers<[1], [0], [0], [1], [0, 0, 1, 1], [], []>} : vector<8x8xbf16>, vector<8x8xbf16>, vector<8x8xf32> -> vector<8x8xf32>
    %57 = vector.extract_strided_slice %22 {offsets = [0, 16], sizes = [8, 8], strides = [1, 1]} : vector<8x32xbf16> to vector<8x8xbf16>
    %58 = vector.extract_strided_slice %23 {offsets = [0, 16], sizes = [8, 8], strides = [1, 1]} : vector<8x32xbf16> to vector<8x8xbf16>
    %59 = vector.extract_strided_slice %24 {offsets = [0, 16], sizes = [8, 8], strides = [1, 1]} : vector<8x32xbf16> to vector<8x8xbf16>
    %cst_24 = arith.constant dense<0.000000e+00> : vector<8x8xf32>
    %60 = tpu.matmul %57, %58, %cst_24 {dimension_numbers = #tpu.dot_dimension_numbers<[1], [1], [0], [0], [0, 0, 1, 0], [], []>} : vector<8x8xbf16>, vector<8x8xbf16>, vector<8x8xf32> -> vector<8x8xf32>
    %cst_25 = arith.constant dense<0xFF800000> : vector<8xf32>
    %61 = vector.multi_reduction <maximumf>, %60, %cst_25 [1] : vector<8x8xf32> to vector<8xf32>
    %62 = vector.shape_cast %61 : vector<8xf32> to vector<8x1xf32>
    %63 = vector.broadcast %62 : vector<8x1xf32> to vector<8x8xf32>
    %64 = arith.subf %60, %63 : vector<8x8xf32>
    %65 = math.exp %64 : vector<8x8xf32>
    %cst_26 = arith.constant dense<0.000000e+00> : vector<8xf32>
    %66 = vector.multi_reduction <add>, %65, %cst_26 [1] : vector<8x8xf32> to vector<8xf32>
    %67 = vector.shape_cast %66 : vector<8xf32> to vector<8x1xf32>
    %68 = tpu.reciprocal %67 {approx = true} : vector<8x1xf32> -> vector<8x1xf32>
    %69 = vector.broadcast %68 : vector<8x1xf32> to vector<8x8xf32>
    %70 = arith.mulf %65, %69 : vector<8x8xf32>
    %71 = arith.truncf %70 : vector<8x8xf32> to vector<8x8xbf16>
    %cst_27 = arith.constant dense<0.000000e+00> : vector<8x8xf32>
    %72 = tpu.matmul %71, %59, %cst_27 {dimension_numbers = #tpu.dot_dimension_numbers<[1], [0], [0], [1], [0, 0, 1, 1], [], []>} : vector<8x8xbf16>, vector<8x8xbf16>, vector<8x8xf32> -> vector<8x8xf32>
    %73 = vector.extract_strided_slice %22 {offsets = [0, 24], sizes = [8, 8], strides = [1, 1]} : vector<8x32xbf16> to vector<8x8xbf16>
    %74 = vector.extract_strided_slice %23 {offsets = [0, 24], sizes = [8, 8], strides = [1, 1]} : vector<8x32xbf16> to vector<8x8xbf16>
    %75 = vector.extract_strided_slice %24 {offsets = [0, 24], sizes = [8, 8], strides = [1, 1]} : vector<8x32xbf16> to vector<8x8xbf16>
    %cst_28 = arith.constant dense<0.000000e+00> : vector<8x8xf32>
    %76 = tpu.matmul %73, %74, %cst_28 {dimension_numbers = #tpu.dot_dimension_numbers<[1], [1], [0], [0], [0, 0, 1, 0], [], []>} : vector<8x8xbf16>, vector<8x8xbf16>, vector<8x8xf32> -> vector<8x8xf32>
    %cst_29 = arith.constant dense<0xFF800000> : vector<8xf32>
    %77 = vector.multi_reduction <maximumf>, %76, %cst_29 [1] : vector<8x8xf32> to vector<8xf32>
    %78 = vector.shape_cast %77 : vector<8xf32> to vector<8x1xf32>
    %79 = vector.broadcast %78 : vector<8x1xf32> to vector<8x8xf32>
    %80 = arith.subf %76, %79 : vector<8x8xf32>
    %81 = math.exp %80 : vector<8x8xf32>
    %cst_30 = arith.constant dense<0.000000e+00> : vector<8xf32>
    %82 = vector.multi_reduction <add>, %81, %cst_30 [1] : vector<8x8xf32> to vector<8xf32>
    %83 = vector.shape_cast %82 : vector<8xf32> to vector<8x1xf32>
    %84 = tpu.reciprocal %83 {approx = true} : vector<8x1xf32> -> vector<8x1xf32>
    %85 = vector.broadcast %84 : vector<8x1xf32> to vector<8x8xf32>
    %86 = arith.mulf %81, %85 : vector<8x8xf32>
    %87 = arith.truncf %86 : vector<8x8xf32> to vector<8x8xbf16>
    %cst_31 = arith.constant dense<0.000000e+00> : vector<8x8xf32>
    %88 = tpu.matmul %87, %75, %cst_31 {dimension_numbers = #tpu.dot_dimension_numbers<[1], [0], [0], [1], [0, 0, 1, 1], [], []>} : vector<8x8xbf16>, vector<8x8xbf16>, vector<8x8xf32> -> vector<8x8xf32>
    %89 = tpu.concatenate %40, %56, %72, %88 in 1 : vector<8x8xf32>, vector<8x8xf32>, vector<8x8xf32>, vector<8x8xf32> -> vector<8x32xf32>
    %90 = vector.extract_strided_slice %17 {offsets = [8, 0], sizes = [8, 32], strides = [1, 1]} : vector<16x32xbf16> to vector<8x32xbf16>
    %91 = vector.extract_strided_slice %19 {offsets = [8, 0], sizes = [8, 32], strides = [1, 1]} : vector<16x32xbf16> to vector<8x32xbf16>
    %92 = vector.extract_strided_slice %21 {offsets = [8, 0], sizes = [8, 32], strides = [1, 1]} : vector<16x32xbf16> to vector<8x32xbf16>
    %93 = vector.extract_strided_slice %90 {offsets = [0, 0], sizes = [8, 8], strides = [1, 1]} : vector<8x32xbf16> to vector<8x8xbf16>
    %94 = vector.extract_strided_slice %91 {offsets = [0, 0], sizes = [8, 8], strides = [1, 1]} : vector<8x32xbf16> to vector<8x8xbf16>
    %95 = vector.extract_strided_slice %92 {offsets = [0, 0], sizes = [8, 8], strides = [1, 1]} : vector<8x32xbf16> to vector<8x8xbf16>
    %cst_32 = arith.constant dense<0.000000e+00> : vector<8x8xf32>
    %96 = tpu.matmul %93, %94, %cst_32 {dimension_numbers = #tpu.dot_dimension_numbers<[1], [1], [0], [0], [0, 0, 1, 0], [], []>} : vector<8x8xbf16>, vector<8x8xbf16>, vector<8x8xf32> -> vector<8x8xf32>
    %cst_33 = arith.constant dense<0xFF800000> : vector<8xf32>
    %97 = vector.multi_reduction <maximumf>, %96, %cst_33 [1] : vector<8x8xf32> to vector<8xf32>
    %98 = vector.shape_cast %97 : vector<8xf32> to vector<8x1xf32>
    %99 = vector.broadcast %98 : vector<8x1xf32> to vector<8x8xf32>
    %100 = arith.subf %96, %99 : vector<8x8xf32>
    %101 = math.exp %100 : vector<8x8xf32>
    %cst_34 = arith.constant dense<0.000000e+00> : vector<8xf32>
    %102 = vector.multi_reduction <add>, %101, %cst_34 [1] : vector<8x8xf32> to vector<8xf32>
    %103 = vector.shape_cast %102 : vector<8xf32> to vector<8x1xf32>
    %104 = tpu.reciprocal %103 {approx = true} : vector<8x1xf32> -> vector<8x1xf32>
    %105 = vector.broadcast %104 : vector<8x1xf32> to vector<8x8xf32>
    %106 = arith.mulf %101, %105 : vector<8x8xf32>
    %107 = arith.truncf %106 : vector<8x8xf32> to vector<8x8xbf16>
    %cst_35 = arith.constant dense<0.000000e+00> : vector<8x8xf32>
    %108 = tpu.matmul %107, %95, %cst_35 {dimension_numbers = #tpu.dot_dimension_numbers<[1], [0], [0], [1], [0, 0, 1, 1], [], []>} : vector<8x8xbf16>, vector<8x8xbf16>, vector<8x8xf32> -> vector<8x8xf32>
    %109 = vector.extract_strided_slice %90 {offsets = [0, 8], sizes = [8, 8], strides = [1, 1]} : vector<8x32xbf16> to vector<8x8xbf16>
    %110 = vector.extract_strided_slice %91 {offsets = [0, 8], sizes = [8, 8], strides = [1, 1]} : vector<8x32xbf16> to vector<8x8xbf16>
    %111 = vector.extract_strided_slice %92 {offsets = [0, 8], sizes = [8, 8], strides = [1, 1]} : vector<8x32xbf16> to vector<8x8xbf16>
    %cst_36 = arith.constant dense<0.000000e+00> : vector<8x8xf32>
    %112 = tpu.matmul %109, %110, %cst_36 {dimension_numbers = #tpu.dot_dimension_numbers<[1], [1], [0], [0], [0, 0, 1, 0], [], []>} : vector<8x8xbf16>, vector<8x8xbf16>, vector<8x8xf32> -> vector<8x8xf32>
    %cst_37 = arith.constant dense<0xFF800000> : vector<8xf32>
    %113 = vector.multi_reduction <maximumf>, %112, %cst_37 [1] : vector<8x8xf32> to vector<8xf32>
    %114 = vector.shape_cast %113 : vector<8xf32> to vector<8x1xf32>
    %115 = vector.broadcast %114 : vector<8x1xf32> to vector<8x8xf32>
    %116 = arith.subf %112, %115 : vector<8x8xf32>
    %117 = math.exp %116 : vector<8x8xf32>
    %cst_38 = arith.constant dense<0.000000e+00> : vector<8xf32>
    %118 = vector.multi_reduction <add>, %117, %cst_38 [1] : vector<8x8xf32> to vector<8xf32>
    %119 = vector.shape_cast %118 : vector<8xf32> to vector<8x1xf32>
    %120 = tpu.reciprocal %119 {approx = true} : vector<8x1xf32> -> vector<8x1xf32>
    %121 = vector.broadcast %120 : vector<8x1xf32> to vector<8x8xf32>
    %122 = arith.mulf %117, %121 : vector<8x8xf32>
    %123 = arith.truncf %122 : vector<8x8xf32> to vector<8x8xbf16>
    %cst_39 = arith.constant dense<0.000000e+00> : vector<8x8xf32>
    %124 = tpu.matmul %123, %111, %cst_39 {dimension_numbers = #tpu.dot_dimension_numbers<[1], [0], [0], [1], [0, 0, 1, 1], [], []>} : vector<8x8xbf16>, vector<8x8xbf16>, vector<8x8xf32> -> vector<8x8xf32>
    %125 = vector.extract_strided_slice %90 {offsets = [0, 16], sizes = [8, 8], strides = [1, 1]} : vector<8x32xbf16> to vector<8x8xbf16>
    %126 = vector.extract_strided_slice %91 {offsets = [0, 16], sizes = [8, 8], strides = [1, 1]} : vector<8x32xbf16> to vector<8x8xbf16>
    %127 = vector.extract_strided_slice %92 {offsets = [0, 16], sizes = [8, 8], strides = [1, 1]} : vector<8x32xbf16> to vector<8x8xbf16>
    %cst_40 = arith.constant dense<0.000000e+00> : vector<8x8xf32>
    %128 = tpu.matmul %125, %126, %cst_40 {dimension_numbers = #tpu.dot_dimension_numbers<[1], [1], [0], [0], [0, 0, 1, 0], [], []>} : vector<8x8xbf16>, vector<8x8xbf16>, vector<8x8xf32> -> vector<8x8xf32>
    %cst_41 = arith.constant dense<0xFF800000> : vector<8xf32>
    %129 = vector.multi_reduction <maximumf>, %128, %cst_41 [1] : vector<8x8xf32> to vector<8xf32>
    %130 = vector.shape_cast %129 : vector<8xf32> to vector<8x1xf32>
    %131 = vector.broadcast %130 : vector<8x1xf32> to vector<8x8xf32>
    %132 = arith.subf %128, %131 : vector<8x8xf32>
    %133 = math.exp %132 : vector<8x8xf32>
    %cst_42 = arith.constant dense<0.000000e+00> : vector<8xf32>
    %134 = vector.multi_reduction <add>, %133, %cst_42 [1] : vector<8x8xf32> to vector<8xf32>
    %135 = vector.shape_cast %134 : vector<8xf32> to vector<8x1xf32>
    %136 = tpu.reciprocal %135 {approx = true} : vector<8x1xf32> -> vector<8x1xf32>
    %137 = vector.broadcast %136 : vector<8x1xf32> to vector<8x8xf32>
    %138 = arith.mulf %133, %137 : vector<8x8xf32>
    %139 = arith.truncf %138 : vector<8x8xf32> to vector<8x8xbf16>
    %cst_43 = arith.constant dense<0.000000e+00> : vector<8x8xf32>
    %140 = tpu.matmul %139, %127, %cst_43 {dimension_numbers = #tpu.dot_dimension_numbers<[1], [0], [0], [1], [0, 0, 1, 1], [], []>} : vector<8x8xbf16>, vector<8x8xbf16>, vector<8x8xf32> -> vector<8x8xf32>
    %141 = vector.extract_strided_slice %90 {offsets = [0, 24], sizes = [8, 8], strides = [1, 1]} : vector<8x32xbf16> to vector<8x8xbf16>
    %142 = vector.extract_strided_slice %91 {offsets = [0, 24], sizes = [8, 8], strides = [1, 1]} : vector<8x32xbf16> to vector<8x8xbf16>
    %143 = vector.extract_strided_slice %92 {offsets = [0, 24], sizes = [8, 8], strides = [1, 1]} : vector<8x32xbf16> to vector<8x8xbf16>
    %cst_44 = arith.constant dense<0.000000e+00> : vector<8x8xf32>
    %144 = tpu.matmul %141, %142, %cst_44 {dimension_numbers = #tpu.dot_dimension_numbers<[1], [1], [0], [0], [0, 0, 1, 0], [], []>} : vector<8x8xbf16>, vector<8x8xbf16>, vector<8x8xf32> -> vector<8x8xf32>
    %cst_45 = arith.constant dense<0xFF800000> : vector<8xf32>
    %145 = vector.multi_reduction <maximumf>, %144, %cst_45 [1] : vector<8x8xf32> to vector<8xf32>
    %146 = vector.shape_cast %145 : vector<8xf32> to vector<8x1xf32>
    %147 = vector.broadcast %146 : vector<8x1xf32> to vector<8x8xf32>
    %148 = arith.subf %144, %147 : vector<8x8xf32>
    %149 = math.exp %148 : vector<8x8xf32>
    %cst_46 = arith.constant dense<0.000000e+00> : vector<8xf32>
    %150 = vector.multi_reduction <add>, %149, %cst_46 [1] : vector<8x8xf32> to vector<8xf32>
    %151 = vector.shape_cast %150 : vector<8xf32> to vector<8x1xf32>
    %152 = tpu.reciprocal %151 {approx = true} : vector<8x1xf32> -> vector<8x1xf32>
    %153 = vector.broadcast %152 : vector<8x1xf32> to vector<8x8xf32>
    %154 = arith.mulf %149, %153 : vector<8x8xf32>
    %155 = arith.truncf %154 : vector<8x8xf32> to vector<8x8xbf16>
    %cst_47 = arith.constant dense<0.000000e+00> : vector<8x8xf32>
    %156 = tpu.matmul %155, %143, %cst_47 {dimension_numbers = #tpu.dot_dimension_numbers<[1], [0], [0], [1], [0, 0, 1, 1], [], []>} : vector<8x8xbf16>, vector<8x8xbf16>, vector<8x8xf32> -> vector<8x8xf32>
    %157 = tpu.concatenate %108, %124, %140, %156 in 1 : vector<8x8xf32>, vector<8x8xf32>, vector<8x8xf32>, vector<8x8xf32> -> vector<8x32xf32>
    %158 = tpu.concatenate %89, %157 in 0 : vector<8x32xf32>, vector<8x32xf32> -> vector<16x32xf32>
    %159 = arith.truncf %158 : vector<16x32xf32> to vector<16x32xbf16>
    %cst_48 = arith.constant dense<0.000000e+00> : vector<16x32xf32>
    %160 = tpu.matmul %159, %7, %cst_48 {dimension_numbers = #tpu.dot_dimension_numbers<[1], [0], [0], [1], [0, 0, 1, 1], [], []>} : vector<16x32xbf16>, vector<32x32xbf16>, vector<16x32xf32> -> vector<16x32xf32>
    %c0_49 = arith.constant 0 : index
    %c0_50 = arith.constant 0 : index
    %161 = vector.load %arg8[%c0_49, %c0_50] : memref<16x32xf32, #tpu.memory_space<vmem>>, vector<16x32xf32>
    tpu.vector_store %arg8[%c0_49, %c0_50], %160 {strides = array<i32>} : memref<16x32xf32, #tpu.memory_space<vmem>>, vector<16x32xf32>,
    return
  }
  func.func @transform_0(%arg0: i32) -> (i32, i32) {
    %c0_i32 = arith.constant 0 : i32
    %c0_i32_0 = arith.constant 0 : i32
    return %arg0, %c0_i32 : i32, i32
  }
  func.func @transform_1(%arg0: i32) -> (i32, i32) {
    %c0_i32 = arith.constant 0 : i32
    %c0_i32_0 = arith.constant 0 : i32
    return %arg0, %c0_i32 : i32, i32
  }
  func.func @transform_2(%arg0: i32) -> (i32, i32) {
    %c0_i32 = arith.constant 0 : i32
    %c0_i32_0 = arith.constant 0 : i32
    return %arg0, %c0_i32 : i32, i32
  }
  func.func @transform_3(%arg0: i32) -> (i32, i32) {
    %c0_i32 = arith.constant 0 : i32
    %c0_i32_0 = arith.constant 0 : i32
    %c0_i32_1 = arith.constant 0 : i32
    return %c0_i32, %c0_i32_0 : i32, i32
  }
  func.func @transform_4(%arg0: i32) -> (i32, i32) {
    %c0_i32 = arith.constant 0 : i32
    %c0_i32_0 = arith.constant 0 : i32
    %c0_i32_1 = arith.constant 0 : i32
    return %c0_i32, %c0_i32_0 : i32, i32
  }
  func.func @transform_5(%arg0: i32) -> (i32, i32) {
    %c0_i32 = arith.constant 0 : i32
    %c0_i32_0 = arith.constant 0 : i32
    %c0_i32_1 = arith.constant 0 : i32
    return %c0_i32, %c0_i32_0 : i32, i32
  }
  func.func @transform_6(%arg0: i32) -> (i32, i32) {
    %c0_i32 = arith.constant 0 : i32
    %c0_i32_0 = arith.constant 0 : i32
    %c0_i32_1 = arith.constant 0 : i32
    return %c0_i32, %c0_i32_0 : i32, i32
  }
  func.func @transform_7(%arg0: i32) -> (i32, i32) {
    %c0_i32 = arith.constant 0 : i32
    %c0_i32_0 = arith.constant 0 : i32
    return %arg0, %c0_i32 : i32, i32
  }
}

</mosaic_0001>

<llo_original>
// kernel: tpu_custom_call.1
$region0: #{tpu_custom_call.1}
  #allocation0 [shape = 'u32[]', space=smem, size = 0x4, offset = 0x4, fixed_abs, tag = 'smem constant byte address 0x4 - core index']
  #allocation1 [shape = 'u32[144,128]{1,0:T(1,128)}', space=vmem, size = 0x12000, scoped, tag = 'internal scratch']
  %s0 = inlined_call_operand.hbm [shape: f32[16,16], index: 0, kind: input, shape index: {}]
  %s1 = inlined_call_operand.hbm [shape: f32[16,16], index: 1, kind: input, shape index: {}]
  %s2 = inlined_call_operand.hbm [shape: f32[16,16], index: 2, kind: input, shape index: {}]
  %s3 = inlined_call_operand.hbm [shape: f32[16,32], index: 3, kind: input, shape index: {}]
  %s4 = inlined_call_operand.hbm [shape: f32[16,32], index: 4, kind: input, shape index: {}]
  %s5 = inlined_call_operand.vmem [shape: f32[16,32], index: 5, kind: input, shape index: {}]
  %s6 = inlined_call_operand.hbm [shape: f32[32,32], index: 6, kind: input, shape index: {}]
  %s7 = inlined_call_operand.hbm [shape: f32[16,32], index: 7, kind: output, shape index: {}]
  %s8 = sld [smem:[#allocation0]]
  $region62: #{tpu_custom_call.1} parent=0
    _
  %s10 = ssub.s32 1, %s8
  %s11 = scalar_select 0, %s10, %s8
  $region1: #{tpu_custom_call.1} parent=0
    #allocation2 [shape = 'u8[8192]{0}', space=vmem, size = 0x2000, scoped, tag = 'input window, operand 0, single buffered']
    #allocation3 [shape = 's32[1]{0}', space=sflag, size = 0x4, scoped, tag = 'scoped memory for tpu_custom_call.1']
    #allocation4 [shape = 's32[1]{0}', space=sflag, size = 0x4, scoped, tag = 'scoped memory for tpu_custom_call.1']
    #allocation5 [shape = 'u8[8192]{0}', space=vmem, size = 0x2000, scoped, tag = 'input window, operand 1, single buffered']
    #allocation6 [shape = 's32[1]{0}', space=sflag, size = 0x4, scoped, tag = 'scoped memory for tpu_custom_call.1']
    #allocation7 [shape = 'u8[8192]{0}', space=vmem, size = 0x2000, scoped, tag = 'input window, operand 2, single buffered']
    #allocation8 [shape = 'u8[8192]{0}', space=vmem, size = 0x2000, scoped, tag = 'input window, operand 3, single buffered']
    #allocation9 [shape = 's32[1]{0}', space=sflag, size = 0x4, scoped, tag = 'scoped memory for tpu_custom_call.1']
    #allocation10 [shape = 'u8[8192]{0}', space=vmem, size = 0x2000, scoped, tag = 'input window, operand 4, single buffered']
    #allocation11 [shape = 'u8[16384]{0}', space=vmem, size = 0x4000, scoped, tag = 'input window, operand 6, single buffered']
    #allocation12 [shape = 's32[1]{0}', space=sflag, size = 0x4, scoped, tag = 'scoped memory for tpu_custom_call.1']
    #allocation13 [shape = 'u8[8192]{0}', space=vmem, size = 0x2000, scoped, tag = 'output window, operand 0, single buffered']
    %12 = vsyncpa [#allocation3], 0
    %13 = vsyncpa [#allocation6], 0
    %14 = vsyncpa [#allocation9], 0
    %15 = vsyncpa [#allocation12], 0
    %16 = vsyncpa [#allocation4], 0
    // Predicated region
    $region2: #{tpu_custom_call.1} parent=1 // pred_check
      _
    $region3: #{tpu_custom_call.1} parent=1 // pred_check_branch
      %18 = sbr.rel (0) target = $region5
    $region4: #{tpu_custom_call.1} parent=1 // pred_region
      %s20 = ssub.s32 256, 256
      %21 = vsyncadd [#allocation3], %s20
      %s22 = sshll.u32 [#allocation2], 4
      %s23 = int_to_ptr.vmem [resolvable:$true] %s22
      %28 = dma.hbm_to_vmem [thread:$0]  %s0, 256, %s23, [#allocation3], 128, 128, 8
    $region5: #{tpu_custom_call.1} parent=1 // pred_fallthru
      _
    // Predicated region
    $region6: #{tpu_custom_call.1} parent=1 // pred_check
      _
    $region7: #{tpu_custom_call.1} parent=1 // pred_check_branch
      %30 = sbr.rel (0) target = $region9
    $region8: #{tpu_custom_call.1} parent=1 // pred_region
      %s32 = ssub.s32 256, 256
      %33 = vsyncadd [#allocation6], %s32
      %s34 = sshll.u32 [#allocation5], 4
      %s35 = int_to_ptr.vmem [resolvable:$true] %s34
      %40 = dma.hbm_to_vmem [thread:$0]  %s1, 256, %s35, [#allocation6], 128, 128, 8
    $region9: #{tpu_custom_call.1} parent=1 // pred_fallthru
      _
    // Predicated region
    $region10: #{tpu_custom_call.1} parent=1 // pred_check
      _
    $region11: #{tpu_custom_call.1} parent=1 // pred_check_branch
      %42 = sbr.rel (0) target = $region13
    $region12: #{tpu_custom_call.1} parent=1 // pred_region
      %s44 = ssub.s32 256, 256
      %45 = vsyncadd [#allocation6], %s44
      %s46 = sshll.u32 [#allocation7], 4
      %s47 = int_to_ptr.vmem [resolvable:$true] %s46
      %52 = dma.hbm_to_vmem [thread:$0]  %s2, 256, %s47, [#allocation6], 128, 128, 8
    $region13: #{tpu_custom_call.1} parent=1 // pred_fallthru
      _
    // Predicated region
    $region14: #{tpu_custom_call.1} parent=1 // pred_check
      _
    $region15: #{tpu_custom_call.1} parent=1 // pred_check_branch
      %54 = sbr.rel (0) target = $region17
    $region16: #{tpu_custom_call.1} parent=1 // pred_region
      %s56 = ssub.s32 256, 256
      %57 = vsyncadd [#allocation9], %s56
      %s58 = sshll.u32 [#allocation8], 4
      %s59 = int_to_ptr.vmem [resolvable:$true] %s58
      %64 = dma.hbm_to_vmem [thread:$0]  %s3, 256, %s59, [#allocation9], 128, 128, 8
    $region17: #{tpu_custom_call.1} parent=1 // pred_fallthru
      _
    // Predicated region
    $region18: #{tpu_custom_call.1} parent=1 // pred_check
      _
    $region19: #{tpu_custom_call.1} parent=1 // pred_check_branch
      %66 = sbr.rel (0) target = $region21
    $region20: #{tpu_custom_call.1} parent=1 // pred_region
      %s68 = ssub.s32 256, 256
      %69 = vsyncadd [#allocation9], %s68
      %s70 = sshll.u32 [#allocation10], 4
      %s71 = int_to_ptr.vmem [resolvable:$true] %s70
      %76 = dma.hbm_to_vmem [thread:$0]  %s4, 256, %s71, [#allocation9], 128, 128, 8
    $region21: #{tpu_custom_call.1} parent=1 // pred_fallthru
      _
    // Predicated region
    $region22: #{tpu_custom_call.1} parent=1 // pred_check
      _
    $region23: #{tpu_custom_call.1} parent=1 // pred_check_branch
      %78 = sbr.rel (0) target = $region25
    $region24: #{tpu_custom_call.1} parent=1 // pred_region
      _
    $region25: #{tpu_custom_call.1} parent=1 // pred_fallthru
      _
    // Predicated region
    $region26: #{tpu_custom_call.1} parent=1 // pred_check
      _
    $region27: #{tpu_custom_call.1} parent=1 // pred_check_branch
      %80 = sbr.rel (0) target = $region29
    $region28: #{tpu_custom_call.1} parent=1 // pred_region
      %s82 = ssub.s32 512, 512
      %83 = vsyncadd [#allocation12], %s82
      %s84 = sshll.u32 [#allocation11], 4
      %s85 = int_to_ptr.vmem [resolvable:$true] %s84
      %90 = dma.hbm_to_vmem [thread:$0]  %s6, 512, %s85, [#allocation12], 128, 128, 8
    $region29: #{tpu_custom_call.1} parent=1 // pred_fallthru
      _
    // Predicated region
    $region30: #{tpu_custom_call.1} parent=1 // pred_check
      _
    $region31: #{tpu_custom_call.1} parent=1 // pred_check_branch
      %92 = sbr.rel (0) target = $region33
    $region32: #{tpu_custom_call.1} parent=1 // pred_region
      %93 = dma.done [#allocation3], 256
    $region33: #{tpu_custom_call.1} parent=1 // pred_fallthru
      _
    // Predicated region
    $region34: #{tpu_custom_call.1} parent=1 // pred_check
      _
    $region35: #{tpu_custom_call.1} parent=1 // pred_check_branch
      %95 = sbr.rel (0) target = $region37
    $region36: #{tpu_custom_call.1} parent=1 // pred_region
      %96 = dma.done [#allocation6], 256
    $region37: #{tpu_custom_call.1} parent=1 // pred_fallthru
      _
    // Predicated region
    $region38: #{tpu_custom_call.1} parent=1 // pred_check
      _
    $region39: #{tpu_custom_call.1} parent=1 // pred_check_branch
      %98 = sbr.rel (0) target = $region41
    $region40: #{tpu_custom_call.1} parent=1 // pred_region
      %99 = dma.done [#allocation6], 256
    $region41: #{tpu_custom_call.1} parent=1 // pred_fallthru
      _
    // Predicated region
    $region42: #{tpu_custom_call.1} parent=1 // pred_check
      _
    $region43: #{tpu_custom_call.1} parent=1 // pred_check_branch
      %101 = sbr.rel (0) target = $region45
    $region44: #{tpu_custom_call.1} parent=1 // pred_region
      %102 = dma.done [#allocation9], 256
    $region45: #{tpu_custom_call.1} parent=1 // pred_fallthru
      _
    // Predicated region
    $region46: #{tpu_custom_call.1} parent=1 // pred_check
      _
    $region47: #{tpu_custom_call.1} parent=1 // pred_check_branch
      %104 = sbr.rel (0) target = $region49
    $region48: #{tpu_custom_call.1} parent=1 // pred_region
      %105 = dma.done [#allocation9], 256
    $region49: #{tpu_custom_call.1} parent=1 // pred_fallthru
      _
    // Predicated region
    $region50: #{tpu_custom_call.1} parent=1 // pred_check
      _
    $region51: #{tpu_custom_call.1} parent=1 // pred_check_branch
      %107 = sbr.rel (0) target = $region53
    $region52: #{tpu_custom_call.1} parent=1 // pred_region
      %108 = dma.done [#allocation12], 512
    $region53: #{tpu_custom_call.1} parent=1 // pred_fallthru
      _
    %v110 = vld [vmem:[#allocation8] sm:$0xff]
    %v111 = vld [vmem:[#allocation8 + $0x8] sm:$0xff]
    %v112 = vpack.c.bf16 %v111, %v110
    %v113 = vld [vmem:[#allocation10] sm:$0xff]
    %v114 = vld [vmem:[#allocation10 + $0x8] sm:$0xff]
    %v115 = vpack.c.bf16 %v114, %v113
    %v116 = vld [vmem:[%s5] sm:$0xff]
    %v117 = vld [vmem:[%s5 + $0x8] sm:$0xff]
    %v118 = vpack.c.bf16 %v117, %v116
    %v119 = vld [vmem:[#allocation11] sm:$0xff]
    %v120 = vld [vmem:[#allocation11 + $0x8] sm:$0xff]
    %v121 = vld [vmem:[#allocation11 + $0x10] sm:$0xff]
    %v122 = vld [vmem:[#allocation11 + $0x18] sm:$0xff]
    %v123 = vpack.c.bf16 %v120, %v119
    %v124 = vpack.c.bf16 %v122, %v121
    %v125 = vld [vmem:[#allocation2] sm:$0xff]
    %v126 = vld [vmem:[#allocation2 + $0x8] sm:$0xff]
    %v127 = vpack.c.bf16 %v126, %v125
    %v128 = vld [vmem:[#allocation5] sm:$0xff]
    %v129 = vld [vmem:[#allocation5 + $0x8] sm:$0xff]
    %v130 = vpack.c.bf16 %v129, %v128
    %v131 = vld [vmem:[#allocation7] sm:$0xff]
    %v132 = vld [vmem:[#allocation7 + $0x8] sm:$0xff]
    %v133 = vpack.c.bf16 %v132, %v131
    %vm134 = vcmask 130048
    %v136 = vsel %vm134, %v127, 0
    %138 = vmatprep.subr.bf16.mxu0 0
    %139 = vmatpush1.bf16.msra.mxu0 %v112
    %140 = vmatprep.subr.bf16.mxu0 0
    %141 = vmatpush1.bf16.msra.mxu0 0
    %142 = vmatprep.subr.bf16.mxu0 0
    %143 = vmatpush1.bf16.msra.mxu0 0
    %144 = vmatprep.subr.bf16.mxu0 0
    %145 = vmatpush1.bf16.msra.mxu0 0
    %146 = vmatprep.subr.bf16.mxu0 0
    %147 = vmatpush1.bf16.msra.mxu0 0
    %148 = vmatprep.subr.bf16.mxu0 0
    %149 = vmatpush1.bf16.msra.mxu0 0
    %150 = vmatprep.subr.bf16.mxu0 0
    %151 = vmatpush1.bf16.msra.mxu0 0
    %152 = vmatprep.subr.bf16.mxu0 0
    %153 = vmatpush1.bf16.msra.mxu0 0
    %154 = vmatprep.subr.bf16.mxu0 0
    %155 = vmatpush1.bf16.msra.mxu0 0
    %156 = vmatprep.subr.bf16.mxu0 0
    %157 = vmatpush1.bf16.msra.mxu0 0
    %158 = vmatprep.subr.bf16.mxu0 0
    %159 = vmatpush1.bf16.msra.mxu0 0
    %160 = vmatprep.subr.bf16.mxu0 0
    %161 = vmatpush1.bf16.msra.mxu0 0
    %162 = vmatprep.subr.bf16.mxu0 0
    %163 = vmatpush1.bf16.msra.mxu0 0
    %164 = vmatprep.subr.bf16.mxu0 0
    %165 = vmatpush1.bf16.msra.mxu0 0
    %166 = vmatprep.subr.bf16.mxu0 0
    %167 = vmatpush1.bf16.msra.mxu0 0
    %168 = vmatprep.subr.bf16.mxu0 0
    %169 = vmatpush1.bf16.msra.mxu0 0
    %170 = vmatprep.mubr.bf16.mxu0 0
    %171 = vmatmul.mubr.bf16.gmra.mrb[0].mxu0 %v136
    %v172 = vpop.f32.mrb[0].mxu0
    %v173 = vadd.f32 0.0, %v172
    %v174 = vpop.f32.mrb[0].mxu0
    %v175 = vpop.f32.mrb[0].mxu0
    %v176 = vadd.f32 0.0, %v175
    %v177 = vpop.f32.mrb[0].mxu0
    %178 = vdwg.mxu0
    %v179 = vmul.f32 %v173, 0.35355338
    %v180 = vmul.f32 %v176, 0.35355338
    %v181 = vpack.c.bf16 %v180, %v179
    %v183 = vsel %vm134, %v130, 0
    %185 = vmatprep.subr.bf16.mxu0 0
    %186 = vmatpush1.bf16.msra.mxu0 %v115
    %187 = vmatprep.subr.bf16.mxu0 0
    %188 = vmatpush1.bf16.msra.mxu0 0
    %189 = vmatprep.subr.bf16.mxu0 0
    %190 = vmatpush1.bf16.msra.mxu0 0
    %191 = vmatprep.subr.bf16.mxu0 0
    %192 = vmatpush1.bf16.msra.mxu0 0
    %193 = vmatprep.subr.bf16.mxu0 0
    %194 = vmatpush1.bf16.msra.mxu0 0
    %195 = vmatprep.subr.bf16.mxu0 0
    %196 = vmatpush1.bf16.msra.mxu0 0
    %197 = vmatprep.subr.bf16.mxu0 0
    %198 = vmatpush1.bf16.msra.mxu0 0
    %199 = vmatprep.subr.bf16.mxu0 0
    %200 = vmatpush1.bf16.msra.mxu0 0
    %201 = vmatprep.subr.bf16.mxu0 0
    %202 = vmatpush1.bf16.msra.mxu0 0
    %203 = vmatprep.subr.bf16.mxu0 0
    %204 = vmatpush1.bf16.msra.mxu0 0
    %205 = vmatprep.subr.bf16.mxu0 0
    %206 = vmatpush1.bf16.msra.mxu0 0
    %207 = vmatprep.subr.bf16.mxu0 0
    %208 = vmatpush1.bf16.msra.mxu0 0
    %209 = vmatprep.subr.bf16.mxu0 0
    %210 = vmatpush1.bf16.msra.mxu0 0
    %211 = vmatprep.subr.bf16.mxu0 0
    %212 = vmatpush1.bf16.msra.mxu0 0
    %213 = vmatprep.subr.bf16.mxu0 0
    %214 = vmatpush1.bf16.msra.mxu0 0
    %215 = vmatprep.subr.bf16.mxu0 0
    %216 = vmatpush1.bf16.msra.mxu0 0
    %217 = vmatprep.mubr.bf16.mxu0 0
    %218 = vmatmul.mubr.bf16.gmra.mrb[0].mxu0 %v183
    %v219 = vpop.f32.mrb[0].mxu0
    %v220 = vadd.f32 0.0, %v219
    %v221 = vpop.f32.mrb[0].mxu0
    %v222 = vpop.f32.mrb[0].mxu0
    %v223 = vadd.f32 0.0, %v222
    %v224 = vpop.f32.mrb[0].mxu0
    %225 = vdwg.mxu0
    %v226 = vpack.c.bf16 %v223, %v220
    %v228 = vsel %vm134, %v133, 0
    %230 = vmatprep.subr.bf16.mxu0 0
    %231 = vmatpush1.bf16.msra.mxu0 %v118
    %232 = vmatprep.subr.bf16.mxu0 0
    %233 = vmatpush1.bf16.msra.mxu0 0
    %234 = vmatprep.subr.bf16.mxu0 0
    %235 = vmatpush1.bf16.msra.mxu0 0
    %236 = vmatprep.subr.bf16.mxu0 0
    %237 = vmatpush1.bf16.msra.mxu0 0
    %238 = vmatprep.subr.bf16.mxu0 0
    %239 = vmatpush1.bf16.msra.mxu0 0
    %240 = vmatprep.subr.bf16.mxu0 0
    %241 = vmatpush1.bf16.msra.mxu0 0
    %242 = vmatprep.subr.bf16.mxu0 0
    %243 = vmatpush1.bf16.msra.mxu0 0
    %244 = vmatprep.subr.bf16.mxu0 0
    %245 = vmatpush1.bf16.msra.mxu0 0
    %246 = vmatprep.subr.bf16.mxu0 0
    %247 = vmatpush1.bf16.msra.mxu0 0
    %248 = vmatprep.subr.bf16.mxu0 0
    %249 = vmatpush1.bf16.msra.mxu0 0
    %250 = vmatprep.subr.bf16.mxu0 0
    %251 = vmatpush1.bf16.msra.mxu0 0
    %252 = vmatprep.subr.bf16.mxu0 0
    %253 = vmatpush1.bf16.msra.mxu0 0
    %254 = vmatprep.subr.bf16.mxu0 0
    %255 = vmatpush1.bf16.msra.mxu0 0
    %256 = vmatprep.subr.bf16.mxu0 0
    %257 = vmatpush1.bf16.msra.mxu0 0
    %258 = vmatprep.subr.bf16.mxu0 0
    %259 = vmatpush1.bf16.msra.mxu0 0
    %260 = vmatprep.subr.bf16.mxu0 0
    %261 = vmatpush1.bf16.msra.mxu0 0
    %262 = vmatprep.mubr.bf16.mxu0 0
    %263 = vmatmul.mubr.bf16.gmra.mrb[0].mxu0 %v228
    %v264 = vpop.f32.mrb[0].mxu0
    %v265 = vadd.f32 0.0, %v264
    %v266 = vpop.f32.mrb[0].mxu0
    %v267 = vpop.f32.mrb[0].mxu0
    %v268 = vadd.f32 0.0, %v267
    %v269 = vpop.f32.mrb[0].mxu0
    %270 = vdwg.mxu0
    %v271 = vpack.c.bf16 %v268, %v265
    %vm272 = vcmask 64512
    %v274 = vsel %vm272, %v181, 0
    %v277 = vsel %vm272, %v226, 0
    %279 = vmatprep.subr.bf16.mxu0 0
    %280 = vmatpush1.bf16.xpose.msra.mxu0 %v277
    %281 = vmatprep.subr.bf16.mxu0 0
    %282 = vmatpush1.bf16.xpose.msra.mxu0 0
    %283 = vmatprep.subr.bf16.mxu0 0
    %284 = vmatpush1.bf16.xpose.msra.mxu0 0
    %285 = vmatprep.subr.bf16.mxu0 0
    %286 = vmatpush1.bf16.xpose.msra.mxu0 0
    %287 = vmatprep.subr.bf16.mxu0 0
    %288 = vmatpush1.bf16.xpose.msra.mxu0 0
    %289 = vmatprep.subr.bf16.mxu0 0
    %290 = vmatpush1.bf16.xpose.msra.mxu0 0
    %291 = vmatprep.subr.bf16.mxu0 0
    %292 = vmatpush1.bf16.xpose.msra.mxu0 0
    %293 = vmatprep.subr.bf16.mxu0 0
    %294 = vmatpush1.bf16.xpose.msra.mxu0 0
    %295 = vmatprep.subr.bf16.mxu0 0
    %296 = vmatpush1.bf16.xpose.msra.mxu0 0
    %297 = vmatprep.subr.bf16.mxu0 0
    %298 = vmatpush1.bf16.xpose.msra.mxu0 0
    %299 = vmatprep.subr.bf16.mxu0 0
    %300 = vmatpush1.bf16.xpose.msra.mxu0 0
    %301 = vmatprep.subr.bf16.mxu0 0
    %302 = vmatpush1.bf16.xpose.msra.mxu0 0
    %303 = vmatprep.subr.bf16.mxu0 0
    %304 = vmatpush1.bf16.xpose.msra.mxu0 0
    %305 = vmatprep.subr.bf16.mxu0 0
    %306 = vmatpush1.bf16.xpose.msra.mxu0 0
    %307 = vmatprep.subr.bf16.mxu0 0
    %308 = vmatpush1.bf16.xpose.msra.mxu0 0
    %309 = vmatprep.subr.bf16.mxu0 0
    %310 = vmatpush1.bf16.xpose.msra.mxu0 0
    %311 = vmatprep.mubr.bf16.mxu0 0
    %312 = vmatmul.mubr.bf16.gmra.mrb[0].mxu0 %v274
    %v313 = vpop.f32.mrb[0].mxu0
    %v314 = vadd.f32 0.0, %v313
    %v315 = vpop.f32.mrb[0].mxu0
    %v316 = vpop.f32.mrb[0].mxu0
    %v317 = vpop.f32.mrb[0].mxu0
    %318 = vdwg.mxu0
    %v319 = vsel %vm272, %v314, -inf
    %320 = vmax.xlane.f32.xlu0 %v319
    %v321 = vpop.xlane.xlu0 %320
    %v322 = vsub.f32 %v314, %v321
    %v323 = vmul.f32 %v322, 1.442695
    %v324 = vpow.pop %v323
    %v325 = vsel %vm272, %v324, 0.0
    %326 = vadd.xlane.f32.xlu0 %v325
    %v327 = vpop.xlane.xlu0 %326
    %v328 = vrcp.pop %v327
    %v329 = vmul.f32 %v324, %v328
    %v330 = vpack.c.bf16 %v329, %v329
    %v332 = vsel %vm272, %v330, 0
    %vm334 = vcmask 1043456
    %v336 = vsel %vm334, %v271, 0
    %338 = vmatprep.subr.bf16.mxu0 0
    %339 = vmatpush1.bf16.msra.mxu0 %v336
    %340 = vmatprep.subr.bf16.mxu0 0
    %341 = vmatpush1.bf16.msra.mxu0 0
    %342 = vmatprep.subr.bf16.mxu0 0
    %343 = vmatpush1.bf16.msra.mxu0 0
    %344 = vmatprep.subr.bf16.mxu0 0
    %345 = vmatpush1.bf16.msra.mxu0 0
    %346 = vmatprep.subr.bf16.mxu0 0
    %347 = vmatpush1.bf16.msra.mxu0 0
    %348 = vmatprep.subr.bf16.mxu0 0
    %349 = vmatpush1.bf16.msra.mxu0 0
    %350 = vmatprep.subr.bf16.mxu0 0
    %351 = vmatpush1.bf16.msra.mxu0 0
    %352 = vmatprep.subr.bf16.mxu0 0
    %353 = vmatpush1.bf16.msra.mxu0 0
    %354 = vmatprep.subr.bf16.mxu0 0
    %355 = vmatpush1.bf16.msra.mxu0 0
    %356 = vmatprep.subr.bf16.mxu0 0
    %357 = vmatpush1.bf16.msra.mxu0 0
    %358 = vmatprep.subr.bf16.mxu0 0
    %359 = vmatpush1.bf16.msra.mxu0 0
    %360 = vmatprep.subr.bf16.mxu0 0
    %361 = vmatpush1.bf16.msra.mxu0 0
    %362 = vmatprep.subr.bf16.mxu0 0
    %363 = vmatpush1.bf16.msra.mxu0 0
    %364 = vmatprep.subr.bf16.mxu0 0
    %365 = vmatpush1.bf16.msra.mxu0 0
    %366 = vmatprep.subr.bf16.mxu0 0
    %367 = vmatpush1.bf16.msra.mxu0 0
    %368 = vmatprep.subr.bf16.mxu0 0
    %369 = vmatpush1.bf16.msra.mxu0 0
    %370 = vmatprep.mubr.bf16.mxu0 0
    %371 = vmatmul.mubr.bf16.gmra.mrb[0].mxu0 %v332
    %v372 = vpop.f32.mrb[0].mxu0
    %v373 = vadd.f32 0.0, %v372
    %v374 = vpop.f32.mrb[0].mxu0
    %v375 = vpop.f32.mrb[0].mxu0
    %v376 = vpop.f32.mrb[0].mxu0
    %377 = vdwg.mxu0
    %379 = vrot.lane.b32.xlu0 %v181, 120
    %v380 = vpop.permute.xlu0 %379
    %382 = vrot.lane.b32.xlu0 %v226, 120
    %v383 = vpop.permute.xlu0 %382
    %v385 = vsel %vm272, %v380, 0
    %v388 = vsel %vm272, %v383, 0
    %390 = vmatprep.subr.bf16.mxu0 0
    %391 = vmatpush1.bf16.xpose.msra.mxu0 %v388
    %392 = vmatprep.subr.bf16.mxu0 0
    %393 = vmatpush1.bf16.xpose.msra.mxu0 0
    %394 = vmatprep.subr.bf16.mxu0 0
    %395 = vmatpush1.bf16.xpose.msra.mxu0 0
    %396 = vmatprep.subr.bf16.mxu0 0
    %397 = vmatpush1.bf16.xpose.msra.mxu0 0
    %398 = vmatprep.subr.bf16.mxu0 0
    %399 = vmatpush1.bf16.xpose.msra.mxu0 0
    %400 = vmatprep.subr.bf16.mxu0 0
    %401 = vmatpush1.bf16.xpose.msra.mxu0 0
    %402 = vmatprep.subr.bf16.mxu0 0
    %403 = vmatpush1.bf16.xpose.msra.mxu0 0
    %404 = vmatprep.subr.bf16.mxu0 0
    %405 = vmatpush1.bf16.xpose.msra.mxu0 0
    %406 = vmatprep.subr.bf16.mxu0 0
    %407 = vmatpush1.bf16.xpose.msra.mxu0 0
    %408 = vmatprep.subr.bf16.mxu0 0
    %409 = vmatpush1.bf16.xpose.msra.mxu0 0
    %410 = vmatprep.subr.bf16.mxu0 0
    %411 = vmatpush1.bf16.xpose.msra.mxu0 0
    %412 = vmatprep.subr.bf16.mxu0 0
    %413 = vmatpush1.bf16.xpose.msra.mxu0 0
    %414 = vmatprep.subr.bf16.mxu0 0
    %415 = vmatpush1.bf16.xpose.msra.mxu0 0
    %416 = vmatprep.subr.bf16.mxu0 0
    %417 = vmatpush1.bf16.xpose.msra.mxu0 0
    %418 = vmatprep.subr.bf16.mxu0 0
    %419 = vmatpush1.bf16.xpose.msra.mxu0 0
    %420 = vmatprep.subr.bf16.mxu0 0
    %421 = vmatpush1.bf16.xpose.msra.mxu0 0
    %422 = vmatprep.mubr.bf16.mxu0 0
    %423 = vmatmul.mubr.bf16.gmra.mrb[0].mxu0 %v385
    %v424 = vpop.f32.mrb[0].mxu0
    %v425 = vadd.f32 0.0, %v424
    %v426 = vpop.f32.mrb[0].mxu0
    %v427 = vpop.f32.mrb[0].mxu0
    %v428 = vpop.f32.mrb[0].mxu0
    %429 = vdwg.mxu0
    %v430 = vsel %vm272, %v425, -inf
    %431 = vmax.xlane.f32.xlu0 %v430
    %v432 = vpop.xlane.xlu0 %431
    %v433 = vsub.f32 %v425, %v432
    %v434 = vmul.f32 %v433, 1.442695
    %v435 = vpow.pop %v434
    %v436 = vsel %vm272, %v435, 0.0
    %437 = vadd.xlane.f32.xlu0 %v436
    %v438 = vpop.xlane.xlu0 %437
    %v439 = vrcp.pop %v438
    %v440 = vmul.f32 %v435, %v439
    %v441 = vpack.c.bf16 %v440, %v440
    %443 = vrot.lane.b32.xlu0 %v271, 120
    %v444 = vpop.permute.xlu0 %443
    %v446 = vsel %vm272, %v441, 0
    %v449 = vsel %vm334, %v444, 0
    %451 = vmatprep.subr.bf16.mxu0 0
    %452 = vmatpush1.bf16.msra.mxu0 %v449
    %453 = vmatprep.subr.bf16.mxu0 0
    %454 = vmatpush1.bf16.msra.mxu0 0
    %455 = vmatprep.subr.bf16.mxu0 0
    %456 = vmatpush1.bf16.msra.mxu0 0
    %457 = vmatprep.subr.bf16.mxu0 0
    %458 = vmatpush1.bf16.msra.mxu0 0
    %459 = vmatprep.subr.bf16.mxu0 0
    %460 = vmatpush1.bf16.msra.mxu0 0
    %461 = vmatprep.subr.bf16.mxu0 0
    %462 = vmatpush1.bf16.msra.mxu0 0
    %463 = vmatprep.subr.bf16.mxu0 0
    %464 = vmatpush1.bf16.msra.mxu0 0
    %465 = vmatprep.subr.bf16.mxu0 0
    %466 = vmatpush1.bf16.msra.mxu0 0
    %467 = vmatprep.subr.bf16.mxu0 0
    %468 = vmatpush1.bf16.msra.mxu0 0
    %469 = vmatprep.subr.bf16.mxu0 0
    %470 = vmatpush1.bf16.msra.mxu0 0
    %471 = vmatprep.subr.bf16.mxu0 0
    %472 = vmatpush1.bf16.msra.mxu0 0
    %473 = vmatprep.subr.bf16.mxu0 0
    %474 = vmatpush1.bf16.msra.mxu0 0
    %475 = vmatprep.subr.bf16.mxu0 0
    %476 = vmatpush1.bf16.msra.mxu0 0
    %477 = vmatprep.subr.bf16.mxu0 0
    %478 = vmatpush1.bf16.msra.mxu0 0
    %479 = vmatprep.subr.bf16.mxu0 0
    %480 = vmatpush1.bf16.msra.mxu0 0
    %481 = vmatprep.subr.bf16.mxu0 0
    %482 = vmatpush1.bf16.msra.mxu0 0
    %483 = vmatprep.mubr.bf16.mxu0 0
    %484 = vmatmul.mubr.bf16.gmra.mrb[0].mxu0 %v446
    %v485 = vpop.f32.mrb[0].mxu0
    %v486 = vadd.f32 0.0, %v485
    %v487 = vpop.f32.mrb[0].mxu0
    %v488 = vpop.f32.mrb[0].mxu0
    %v489 = vpop.f32.mrb[0].mxu0
    %490 = vdwg.mxu0
    %491 = vrot.lane.b32.xlu0 %v181, 112
    %v492 = vpop.permute.xlu0 %491
    %493 = vrot.lane.b32.xlu0 %v226, 112
    %v494 = vpop.permute.xlu0 %493
    %v496 = vsel %vm272, %v492, 0
    %v499 = vsel %vm272, %v494, 0
    %501 = vmatprep.subr.bf16.mxu0 0
    %502 = vmatpush1.bf16.xpose.msra.mxu0 %v499
    %503 = vmatprep.subr.bf16.mxu0 0
    %504 = vmatpush1.bf16.xpose.msra.mxu0 0
    %505 = vmatprep.subr.bf16.mxu0 0
    %506 = vmatpush1.bf16.xpose.msra.mxu0 0
    %507 = vmatprep.subr.bf16.mxu0 0
    %508 = vmatpush1.bf16.xpose.msra.mxu0 0
    %509 = vmatprep.subr.bf16.mxu0 0
    %510 = vmatpush1.bf16.xpose.msra.mxu0 0
    %511 = vmatprep.subr.bf16.mxu0 0
    %512 = vmatpush1.bf16.xpose.msra.mxu0 0
    %513 = vmatprep.subr.bf16.mxu0 0
    %514 = vmatpush1.bf16.xpose.msra.mxu0 0
    %515 = vmatprep.subr.bf16.mxu0 0
    %516 = vmatpush1.bf16.xpose.msra.mxu0 0
    %517 = vmatprep.subr.bf16.mxu0 0
    %518 = vmatpush1.bf16.xpose.msra.mxu0 0
    %519 = vmatprep.subr.bf16.mxu0 0
    %520 = vmatpush1.bf16.xpose.msra.mxu0 0
    %521 = vmatprep.subr.bf16.mxu0 0
    %522 = vmatpush1.bf16.xpose.msra.mxu0 0
    %523 = vmatprep.subr.bf16.mxu0 0
    %524 = vmatpush1.bf16.xpose.msra.mxu0 0
    %525 = vmatprep.subr.bf16.mxu0 0
    %526 = vmatpush1.bf16.xpose.msra.mxu0 0
    %527 = vmatprep.subr.bf16.mxu0 0
    %528 = vmatpush1.bf16.xpose.msra.mxu0 0
    %529 = vmatprep.subr.bf16.mxu0 0
    %530 = vmatpush1.bf16.xpose.msra.mxu0 0
    %531 = vmatprep.subr.bf16.mxu0 0
    %532 = vmatpush1.bf16.xpose.msra.mxu0 0
    %533 = vmatprep.mubr.bf16.mxu0 0
    %534 = vmatmul.mubr.bf16.gmra.mrb[0].mxu0 %v496
    %v535 = vpop.f32.mrb[0].mxu0
    %v536 = vadd.f32 0.0, %v535
    %v537 = vpop.f32.mrb[0].mxu0
    %v538 = vpop.f32.mrb[0].mxu0
    %v539 = vpop.f32.mrb[0].mxu0
    %540 = vdwg.mxu0
    %v541 = vsel %vm272, %v536, -inf
    %542 = vmax.xlane.f32.xlu0 %v541
    %v543 = vpop.xlane.xlu0 %542
    %v544 = vsub.f32 %v536, %v543
    %v545 = vmul.f32 %v544, 1.442695
    %v546 = vpow.pop %v545
    %v547 = vsel %vm272, %v546, 0.0
    %548 = vadd.xlane.f32.xlu0 %v547
    %v549 = vpop.xlane.xlu0 %548
    %v550 = vrcp.pop %v549
    %v551 = vmul.f32 %v546, %v550
    %v552 = vpack.c.bf16 %v551, %v551
    %553 = vrot.lane.b32.xlu0 %v271, 112
    %v554 = vpop.permute.xlu0 %553
    %v556 = vsel %vm272, %v552, 0
    %v559 = vsel %vm334, %v554, 0
    %561 = vmatprep.subr.bf16.mxu0 0
    %562 = vmatpush1.bf16.msra.mxu0 %v559
    %563 = vmatprep.subr.bf16.mxu0 0
    %564 = vmatpush1.bf16.msra.mxu0 0
    %565 = vmatprep.subr.bf16.mxu0 0
    %566 = vmatpush1.bf16.msra.mxu0 0
    %567 = vmatprep.subr.bf16.mxu0 0
    %568 = vmatpush1.bf16.msra.mxu0 0
    %569 = vmatprep.subr.bf16.mxu0 0
    %570 = vmatpush1.bf16.msra.mxu0 0
    %571 = vmatprep.subr.bf16.mxu0 0
    %572 = vmatpush1.bf16.msra.mxu0 0
    %573 = vmatprep.subr.bf16.mxu0 0
    %574 = vmatpush1.bf16.msra.mxu0 0
    %575 = vmatprep.subr.bf16.mxu0 0
    %576 = vmatpush1.bf16.msra.mxu0 0
    %577 = vmatprep.subr.bf16.mxu0 0
    %578 = vmatpush1.bf16.msra.mxu0 0
    %579 = vmatprep.subr.bf16.mxu0 0
    %580 = vmatpush1.bf16.msra.mxu0 0
    %581 = vmatprep.subr.bf16.mxu0 0
    %582 = vmatpush1.bf16.msra.mxu0 0
    %583 = vmatprep.subr.bf16.mxu0 0
    %584 = vmatpush1.bf16.msra.mxu0 0
    %585 = vmatprep.subr.bf16.mxu0 0
    %586 = vmatpush1.bf16.msra.mxu0 0
    %587 = vmatprep.subr.bf16.mxu0 0
    %588 = vmatpush1.bf16.msra.mxu0 0
    %589 = vmatprep.subr.bf16.mxu0 0
    %590 = vmatpush1.bf16.msra.mxu0 0
    %591 = vmatprep.subr.bf16.mxu0 0
    %592 = vmatpush1.bf16.msra.mxu0 0
    %593 = vmatprep.mubr.bf16.mxu0 0
    %594 = vmatmul.mubr.bf16.gmra.mrb[0].mxu0 %v556
    %v595 = vpop.f32.mrb[0].mxu0
    %v596 = vadd.f32 0.0, %v595
    %v597 = vpop.f32.mrb[0].mxu0
    %v598 = vpop.f32.mrb[0].mxu0
    %v599 = vpop.f32.mrb[0].mxu0
    %600 = vdwg.mxu0
    %601 = vrot.lane.b32.xlu0 %v181, 104
    %v602 = vpop.permute.xlu0 %601
    %603 = vrot.lane.b32.xlu0 %v226, 104
    %v604 = vpop.permute.xlu0 %603
    %v606 = vsel %vm272, %v602, 0
    %v609 = vsel %vm272, %v604, 0
    %611 = vmatprep.subr.bf16.mxu0 0
    %612 = vmatpush1.bf16.xpose.msra.mxu0 %v609
    %613 = vmatprep.subr.bf16.mxu0 0
    %614 = vmatpush1.bf16.xpose.msra.mxu0 0
    %615 = vmatprep.subr.bf16.mxu0 0
    %616 = vmatpush1.bf16.xpose.msra.mxu0 0
    %617 = vmatprep.subr.bf16.mxu0 0
    %618 = vmatpush1.bf16.xpose.msra.mxu0 0
    %619 = vmatprep.subr.bf16.mxu0 0
    %620 = vmatpush1.bf16.xpose.msra.mxu0 0
    %621 = vmatprep.subr.bf16.mxu0 0
    %622 = vmatpush1.bf16.xpose.msra.mxu0 0
    %623 = vmatprep.subr.bf16.mxu0 0
    %624 = vmatpush1.bf16.xpose.msra.mxu0 0
    %625 = vmatprep.subr.bf16.mxu0 0
    %626 = vmatpush1.bf16.xpose.msra.mxu0 0
    %627 = vmatprep.subr.bf16.mxu0 0
    %628 = vmatpush1.bf16.xpose.msra.mxu0 0
    %629 = vmatprep.subr.bf16.mxu0 0
    %630 = vmatpush1.bf16.xpose.msra.mxu0 0
    %631 = vmatprep.subr.bf16.mxu0 0
    %632 = vmatpush1.bf16.xpose.msra.mxu0 0
    %633 = vmatprep.subr.bf16.mxu0 0
    %634 = vmatpush1.bf16.xpose.msra.mxu0 0
    %635 = vmatprep.subr.bf16.mxu0 0
    %636 = vmatpush1.bf16.xpose.msra.mxu0 0
    %637 = vmatprep.subr.bf16.mxu0 0
    %638 = vmatpush1.bf16.xpose.msra.mxu0 0
    %639 = vmatprep.subr.bf16.mxu0 0
    %640 = vmatpush1.bf16.xpose.msra.mxu0 0
    %641 = vmatprep.subr.bf16.mxu0 0
    %642 = vmatpush1.bf16.xpose.msra.mxu0 0
    %643 = vmatprep.mubr.bf16.mxu0 0
    %644 = vmatmul.mubr.bf16.gmra.mrb[0].mxu0 %v606
    %v645 = vpop.f32.mrb[0].mxu0
    %v646 = vadd.f32 0.0, %v645
    %v647 = vpop.f32.mrb[0].mxu0
    %v648 = vpop.f32.mrb[0].mxu0
    %v649 = vpop.f32.mrb[0].mxu0
    %650 = vdwg.mxu0
    %v651 = vsel %vm272, %v646, -inf
    %652 = vmax.xlane.f32.xlu0 %v651
    %v653 = vpop.xlane.xlu0 %652
    %v654 = vsub.f32 %v646, %v653
    %v655 = vmul.f32 %v654, 1.442695
    %v656 = vpow.pop %v655
    %v657 = vsel %vm272, %v656, 0.0
    %658 = vadd.xlane.f32.xlu0 %v657
    %v659 = vpop.xlane.xlu0 %658
    %v660 = vrcp.pop %v659
    %v661 = vmul.f32 %v656, %v660
    %v662 = vpack.c.bf16 %v661, %v661
    %663 = vrot.lane.b32.xlu0 %v271, 104
    %v664 = vpop.permute.xlu0 %663
    %v666 = vsel %vm272, %v662, 0
    %v669 = vsel %vm334, %v664, 0
    %671 = vmatprep.subr.bf16.mxu0 0
    %672 = vmatpush1.bf16.msra.mxu0 %v669
    %673 = vmatprep.subr.bf16.mxu0 0
    %674 = vmatpush1.bf16.msra.mxu0 0
    %675 = vmatprep.subr.bf16.mxu0 0
    %676 = vmatpush1.bf16.msra.mxu0 0
    %677 = vmatprep.subr.bf16.mxu0 0
    %678 = vmatpush1.bf16.msra.mxu0 0
    %679 = vmatprep.subr.bf16.mxu0 0
    %680 = vmatpush1.bf16.msra.mxu0 0
    %681 = vmatprep.subr.bf16.mxu0 0
    %682 = vmatpush1.bf16.msra.mxu0 0
    %683 = vmatprep.subr.bf16.mxu0 0
    %684 = vmatpush1.bf16.msra.mxu0 0
    %685 = vmatprep.subr.bf16.mxu0 0
    %686 = vmatpush1.bf16.msra.mxu0 0
    %687 = vmatprep.subr.bf16.mxu0 0
    %688 = vmatpush1.bf16.msra.mxu0 0
    %689 = vmatprep.subr.bf16.mxu0 0
    %690 = vmatpush1.bf16.msra.mxu0 0
    %691 = vmatprep.subr.bf16.mxu0 0
    %692 = vmatpush1.bf16.msra.mxu0 0
    %693 = vmatprep.subr.bf16.mxu0 0
    %694 = vmatpush1.bf16.msra.mxu0 0
    %695 = vmatprep.subr.bf16.mxu0 0
    %696 = vmatpush1.bf16.msra.mxu0 0
    %697 = vmatprep.subr.bf16.mxu0 0
    %698 = vmatpush1.bf16.msra.mxu0 0
    %699 = vmatprep.subr.bf16.mxu0 0
    %700 = vmatpush1.bf16.msra.mxu0 0
    %701 = vmatprep.subr.bf16.mxu0 0
    %702 = vmatpush1.bf16.msra.mxu0 0
    %703 = vmatprep.mubr.bf16.mxu0 0
    %704 = vmatmul.mubr.bf16.gmra.mrb[0].mxu0 %v666
    %v705 = vpop.f32.mrb[0].mxu0
    %v706 = vadd.f32 0.0, %v705
    %v707 = vpop.f32.mrb[0].mxu0
    %v708 = vpop.f32.mrb[0].mxu0
    %v709 = vpop.f32.mrb[0].mxu0
    %710 = vdwg.mxu0
    %712 = vrot.lane.b32.xlu0 %v486, 8
    %v713 = vpop.permute.xlu0 %712
    %716 = vrot.lane.b32.xlu0 %v596, 16
    %v717 = vpop.permute.xlu0 %716
    %720 = vrot.lane.b32.xlu0 %v706, 24
    %v721 = vpop.permute.xlu0 %720
    %v723 = vsel %vm272, %v373, %v713
    %v724 = vsel %vm134, %v723, %v717
    %vm725 = vcmask 195584
    %v726 = vsel %vm725, %v724, %v721
    %v727 = vrot.slane %v181, 4
    %v728 = vrot.slane %v226, 4
    %v730 = vsel %vm272, %v727, 0
    %v733 = vsel %vm272, %v728, 0
    %735 = vmatprep.subr.bf16.mxu0 0
    %736 = vmatpush1.bf16.xpose.msra.mxu0 %v733
    %737 = vmatprep.subr.bf16.mxu0 0
    %738 = vmatpush1.bf16.xpose.msra.mxu0 0
    %739 = vmatprep.subr.bf16.mxu0 0
    %740 = vmatpush1.bf16.xpose.msra.mxu0 0
    %741 = vmatprep.subr.bf16.mxu0 0
    %742 = vmatpush1.bf16.xpose.msra.mxu0 0
    %743 = vmatprep.subr.bf16.mxu0 0
    %744 = vmatpush1.bf16.xpose.msra.mxu0 0
    %745 = vmatprep.subr.bf16.mxu0 0
    %746 = vmatpush1.bf16.xpose.msra.mxu0 0
    %747 = vmatprep.subr.bf16.mxu0 0
    %748 = vmatpush1.bf16.xpose.msra.mxu0 0
    %749 = vmatprep.subr.bf16.mxu0 0
    %750 = vmatpush1.bf16.xpose.msra.mxu0 0
    %751 = vmatprep.subr.bf16.mxu0 0
    %752 = vmatpush1.bf16.xpose.msra.mxu0 0
    %753 = vmatprep.subr.bf16.mxu0 0
    %754 = vmatpush1.bf16.xpose.msra.mxu0 0
    %755 = vmatprep.subr.bf16.mxu0 0
    %756 = vmatpush1.bf16.xpose.msra.mxu0 0
    %757 = vmatprep.subr.bf16.mxu0 0
    %758 = vmatpush1.bf16.xpose.msra.mxu0 0
    %759 = vmatprep.subr.bf16.mxu0 0
    %760 = vmatpush1.bf16.xpose.msra.mxu0 0
    %761 = vmatprep.subr.bf16.mxu0 0
    %762 = vmatpush1.bf16.xpose.msra.mxu0 0
    %763 = vmatprep.subr.bf16.mxu0 0
    %764 = vmatpush1.bf16.xpose.msra.mxu0 0
    %765 = vmatprep.subr.bf16.mxu0 0
    %766 = vmatpush1.bf16.xpose.msra.mxu0 0
    %767 = vmatprep.mubr.bf16.mxu0 0
    %768 = vmatmul.mubr.bf16.gmra.mrb[0].mxu0 %v730
    %v769 = vpop.f32.mrb[0].mxu0
    %v770 = vadd.f32 0.0, %v769
    %v771 = vpop.f32.mrb[0].mxu0
    %v772 = vpop.f32.mrb[0].mxu0
    %v773 = vpop.f32.mrb[0].mxu0
    %774 = vdwg.mxu0
    %v775 = vsel %vm272, %v770, -inf
    %776 = vmax.xlane.f32.xlu0 %v775
    %v777 = vpop.xlane.xlu0 %776
    %v778 = vsub.f32 %v770, %v777
    %v779 = vmul.f32 %v778, 1.442695
    %v780 = vpow.pop %v779
    %v781 = vsel %vm272, %v780, 0.0
    %782 = vadd.xlane.f32.xlu0 %v781
    %v783 = vpop.xlane.xlu0 %782
    %v784 = vrcp.pop %v783
    %v785 = vmul.f32 %v780, %v784
    %v786 = vpack.c.bf16 %v785, %v785
    %v787 = vrot.slane %v271, 4
    %v789 = vsel %vm272, %v786, 0
    %v792 = vsel %vm334, %v787, 0
    %794 = vmatprep.subr.bf16.mxu0 0
    %795 = vmatpush1.bf16.msra.mxu0 %v792
    %796 = vmatprep.subr.bf16.mxu0 0
    %797 = vmatpush1.bf16.msra.mxu0 0
    %798 = vmatprep.subr.bf16.mxu0 0
    %799 = vmatpush1.bf16.msra.mxu0 0
    %800 = vmatprep.subr.bf16.mxu0 0
    %801 = vmatpush1.bf16.msra.mxu0 0
    %802 = vmatprep.subr.bf16.mxu0 0
    %803 = vmatpush1.bf16.msra.mxu0 0
    %804 = vmatprep.subr.bf16.mxu0 0
    %805 = vmatpush1.bf16.msra.mxu0 0
    %806 = vmatprep.subr.bf16.mxu0 0
    %807 = vmatpush1.bf16.msra.mxu0 0
    %808 = vmatprep.subr.bf16.mxu0 0
    %809 = vmatpush1.bf16.msra.mxu0 0
    %810 = vmatprep.subr.bf16.mxu0 0
    %811 = vmatpush1.bf16.msra.mxu0 0
    %812 = vmatprep.subr.bf16.mxu0 0
    %813 = vmatpush1.bf16.msra.mxu0 0
    %814 = vmatprep.subr.bf16.mxu0 0
    %815 = vmatpush1.bf16.msra.mxu0 0
    %816 = vmatprep.subr.bf16.mxu0 0
    %817 = vmatpush1.bf16.msra.mxu0 0
    %818 = vmatprep.subr.bf16.mxu0 0
    %819 = vmatpush1.bf16.msra.mxu0 0
    %820 = vmatprep.subr.bf16.mxu0 0
    %821 = vmatpush1.bf16.msra.mxu0 0
    %822 = vmatprep.subr.bf16.mxu0 0
    %823 = vmatpush1.bf16.msra.mxu0 0
    %824 = vmatprep.subr.bf16.mxu0 0
    %825 = vmatpush1.bf16.msra.mxu0 0
    %826 = vmatprep.mubr.bf16.mxu0 0
    %827 = vmatmul.mubr.bf16.gmra.mrb[0].mxu0 %v789
    %v828 = vpop.f32.mrb[0].mxu0
    %v829 = vadd.f32 0.0, %v828
    %v830 = vpop.f32.mrb[0].mxu0
    %v831 = vpop.f32.mrb[0].mxu0
    %v832 = vpop.f32.mrb[0].mxu0
    %833 = vdwg.mxu0
    %834 = vrot.lane.b32.xlu0 %v727, 120
    %v835 = vpop.permute.xlu0 %834
    %836 = vrot.lane.b32.xlu0 %v728, 120
    %v837 = vpop.permute.xlu0 %836
    %v839 = vsel %vm272, %v835, 0
    %v842 = vsel %vm272, %v837, 0
    %844 = vmatprep.subr.bf16.mxu0 0
    %845 = vmatpush1.bf16.xpose.msra.mxu0 %v842
    %846 = vmatprep.subr.bf16.mxu0 0
    %847 = vmatpush1.bf16.xpose.msra.mxu0 0
    %848 = vmatprep.subr.bf16.mxu0 0
    %849 = vmatpush1.bf16.xpose.msra.mxu0 0
    %850 = vmatprep.subr.bf16.mxu0 0
    %851 = vmatpush1.bf16.xpose.msra.mxu0 0
    %852 = vmatprep.subr.bf16.mxu0 0
    %853 = vmatpush1.bf16.xpose.msra.mxu0 0
    %854 = vmatprep.subr.bf16.mxu0 0
    %855 = vmatpush1.bf16.xpose.msra.mxu0 0
    %856 = vmatprep.subr.bf16.mxu0 0
    %857 = vmatpush1.bf16.xpose.msra.mxu0 0
    %858 = vmatprep.subr.bf16.mxu0 0
    %859 = vmatpush1.bf16.xpose.msra.mxu0 0
    %860 = vmatprep.subr.bf16.mxu0 0
    %861 = vmatpush1.bf16.xpose.msra.mxu0 0
    %862 = vmatprep.subr.bf16.mxu0 0
    %863 = vmatpush1.bf16.xpose.msra.mxu0 0
    %864 = vmatprep.subr.bf16.mxu0 0
    %865 = vmatpush1.bf16.xpose.msra.mxu0 0
    %866 = vmatprep.subr.bf16.mxu0 0
    %867 = vmatpush1.bf16.xpose.msra.mxu0 0
    %868 = vmatprep.subr.bf16.mxu0 0
    %869 = vmatpush1.bf16.xpose.msra.mxu0 0
    %870 = vmatprep.subr.bf16.mxu0 0
    %871 = vmatpush1.bf16.xpose.msra.mxu0 0
    %872 = vmatprep.subr.bf16.mxu0 0
    %873 = vmatpush1.bf16.xpose.msra.mxu0 0
    %874 = vmatprep.subr.bf16.mxu0 0
    %875 = vmatpush1.bf16.xpose.msra.mxu0 0
    %876 = vmatprep.mubr.bf16.mxu0 0
    %877 = vmatmul.mubr.bf16.gmra.mrb[0].mxu0 %v839
    %v878 = vpop.f32.mrb[0].mxu0
    %v879 = vadd.f32 0.0, %v878
    %v880 = vpop.f32.mrb[0].mxu0
    %v881 = vpop.f32.mrb[0].mxu0
    %v882 = vpop.f32.mrb[0].mxu0
    %883 = vdwg.mxu0
    %v884 = vsel %vm272, %v879, -inf
    %885 = vmax.xlane.f32.xlu0 %v884
    %v886 = vpop.xlane.xlu0 %885
    %v887 = vsub.f32 %v879, %v886
    %v888 = vmul.f32 %v887, 1.442695
    %v889 = vpow.pop %v888
    %v890 = vsel %vm272, %v889, 0.0
    %891 = vadd.xlane.f32.xlu0 %v890
    %v892 = vpop.xlane.xlu0 %891
    %v893 = vrcp.pop %v892
    %v894 = vmul.f32 %v889, %v893
    %v895 = vpack.c.bf16 %v894, %v894
    %896 = vrot.lane.b32.xlu0 %v787, 120
    %v897 = vpop.permute.xlu0 %896
    %v899 = vsel %vm272, %v895, 0
    %v902 = vsel %vm334, %v897, 0
    %904 = vmatprep.subr.bf16.mxu0 0
    %905 = vmatpush1.bf16.msra.mxu0 %v902
    %906 = vmatprep.subr.bf16.mxu0 0
    %907 = vmatpush1.bf16.msra.mxu0 0
    %908 = vmatprep.subr.bf16.mxu0 0
    %909 = vmatpush1.bf16.msra.mxu0 0
    %910 = vmatprep.subr.bf16.mxu0 0
    %911 = vmatpush1.bf16.msra.mxu0 0
    %912 = vmatprep.subr.bf16.mxu0 0
    %913 = vmatpush1.bf16.msra.mxu0 0
    %914 = vmatprep.subr.bf16.mxu0 0
    %915 = vmatpush1.bf16.msra.mxu0 0
    %916 = vmatprep.subr.bf16.mxu0 0
    %917 = vmatpush1.bf16.msra.mxu0 0
    %918 = vmatprep.subr.bf16.mxu0 0
    %919 = vmatpush1.bf16.msra.mxu0 0
    %920 = vmatprep.subr.bf16.mxu0 0
    %921 = vmatpush1.bf16.msra.mxu0 0
    %922 = vmatprep.subr.bf16.mxu0 0
    %923 = vmatpush1.bf16.msra.mxu0 0
    %924 = vmatprep.subr.bf16.mxu0 0
    %925 = vmatpush1.bf16.msra.mxu0 0
    %926 = vmatprep.subr.bf16.mxu0 0
    %927 = vmatpush1.bf16.msra.mxu0 0
    %928 = vmatprep.subr.bf16.mxu0 0
    %929 = vmatpush1.bf16.msra.mxu0 0
    %930 = vmatprep.subr.bf16.mxu0 0
    %931 = vmatpush1.bf16.msra.mxu0 0
    %932 = vmatprep.subr.bf16.mxu0 0
    %933 = vmatpush1.bf16.msra.mxu0 0
    %934 = vmatprep.subr.bf16.mxu0 0
    %935 = vmatpush1.bf16.msra.mxu0 0
    %936 = vmatprep.mubr.bf16.mxu0 0
    %937 = vmatmul.mubr.bf16.gmra.mrb[0].mxu0 %v899
    %v938 = vpop.f32.mrb[0].mxu0
    %v939 = vadd.f32 0.0, %v938
    %v940 = vpop.f32.mrb[0].mxu0
    %v941 = vpop.f32.mrb[0].mxu0
    %v942 = vpop.f32.mrb[0].mxu0
    %943 = vdwg.mxu0
    %944 = vrot.lane.b32.xlu0 %v727, 112
    %v945 = vpop.permute.xlu0 %944
    %946 = vrot.lane.b32.xlu0 %v728, 112
    %v947 = vpop.permute.xlu0 %946
    %v949 = vsel %vm272, %v945, 0
    %v952 = vsel %vm272, %v947, 0
    %954 = vmatprep.subr.bf16.mxu0 0
    %955 = vmatpush1.bf16.xpose.msra.mxu0 %v952
    %956 = vmatprep.subr.bf16.mxu0 0
    %957 = vmatpush1.bf16.xpose.msra.mxu0 0
    %958 = vmatprep.subr.bf16.mxu0 0
    %959 = vmatpush1.bf16.xpose.msra.mxu0 0
    %960 = vmatprep.subr.bf16.mxu0 0
    %961 = vmatpush1.bf16.xpose.msra.mxu0 0
    %962 = vmatprep.subr.bf16.mxu0 0
    %963 = vmatpush1.bf16.xpose.msra.mxu0 0
    %964 = vmatprep.subr.bf16.mxu0 0
    %965 = vmatpush1.bf16.xpose.msra.mxu0 0
    %966 = vmatprep.subr.bf16.mxu0 0
    %967 = vmatpush1.bf16.xpose.msra.mxu0 0
    %968 = vmatprep.subr.bf16.mxu0 0
    %969 = vmatpush1.bf16.xpose.msra.mxu0 0
    %970 = vmatprep.subr.bf16.mxu0 0
    %971 = vmatpush1.bf16.xpose.msra.mxu0 0
    %972 = vmatprep.subr.bf16.mxu0 0
    %973 = vmatpush1.bf16.xpose.msra.mxu0 0
    %974 = vmatprep.subr.bf16.mxu0 0
    %975 = vmatpush1.bf16.xpose.msra.mxu0 0
    %976 = vmatprep.subr.bf16.mxu0 0
    %977 = vmatpush1.bf16.xpose.msra.mxu0 0
    %978 = vmatprep.subr.bf16.mxu0 0
    %979 = vmatpush1.bf16.xpose.msra.mxu0 0
    %980 = vmatprep.subr.bf16.mxu0 0
    %981 = vmatpush1.bf16.xpose.msra.mxu0 0
    %982 = vmatprep.subr.bf16.mxu0 0
    %983 = vmatpush1.bf16.xpose.msra.mxu0 0
    %984 = vmatprep.subr.bf16.mxu0 0
    %985 = vmatpush1.bf16.xpose.msra.mxu0 0
    %986 = vmatprep.mubr.bf16.mxu0 0
    %987 = vmatmul.mubr.bf16.gmra.mrb[0].mxu0 %v949
    %v988 = vpop.f32.mrb[0].mxu0
    %v989 = vadd.f32 0.0, %v988
    %v990 = vpop.f32.mrb[0].mxu0
    %v991 = vpop.f32.mrb[0].mxu0
    %v992 = vpop.f32.mrb[0].mxu0
    %993 = vdwg.mxu0
    %v994 = vsel %vm272, %v989, -inf
    %995 = vmax.xlane.f32.xlu0 %v994
    %v996 = vpop.xlane.xlu0 %995
    %v997 = vsub.f32 %v989, %v996
    %v998 = vmul.f32 %v997, 1.442695
    %v999 = vpow.pop %v998
    %v1000 = vsel %vm272, %v999, 0.0
    %1001 = vadd.xlane.f32.xlu0 %v1000
    %v1002 = vpop.xlane.xlu0 %1001
    %v1003 = vrcp.pop %v1002
    %v1004 = vmul.f32 %v999, %v1003
    %v1005 = vpack.c.bf16 %v1004, %v1004
    %1006 = vrot.lane.b32.xlu0 %v787, 112
    %v1007 = vpop.permute.xlu0 %1006
    %v1009 = vsel %vm272, %v1005, 0
    %v1012 = vsel %vm334, %v1007, 0
    %1014 = vmatprep.subr.bf16.mxu0 0
    %1015 = vmatpush1.bf16.msra.mxu0 %v1012
    %1016 = vmatprep.subr.bf16.mxu0 0
    %1017 = vmatpush1.bf16.msra.mxu0 0
    %1018 = vmatprep.subr.bf16.mxu0 0
    %1019 = vmatpush1.bf16.msra.mxu0 0
    %1020 = vmatprep.subr.bf16.mxu0 0
    %1021 = vmatpush1.bf16.msra.mxu0 0
    %1022 = vmatprep.subr.bf16.mxu0 0
    %1023 = vmatpush1.bf16.msra.mxu0 0
    %1024 = vmatprep.subr.bf16.mxu0 0
    %1025 = vmatpush1.bf16.msra.mxu0 0
    %1026 = vmatprep.subr.bf16.mxu0 0
    %1027 = vmatpush1.bf16.msra.mxu0 0
    %1028 = vmatprep.subr.bf16.mxu0 0
    %1029 = vmatpush1.bf16.msra.mxu0 0
    %1030 = vmatprep.subr.bf16.mxu0 0
    %1031 = vmatpush1.bf16.msra.mxu0 0
    %1032 = vmatprep.subr.bf16.mxu0 0
    %1033 = vmatpush1.bf16.msra.mxu0 0
    %1034 = vmatprep.subr.bf16.mxu0 0
    %1035 = vmatpush1.bf16.msra.mxu0 0
    %1036 = vmatprep.subr.bf16.mxu0 0
    %1037 = vmatpush1.bf16.msra.mxu0 0
    %1038 = vmatprep.subr.bf16.mxu0 0
    %1039 = vmatpush1.bf16.msra.mxu0 0
    %1040 = vmatprep.subr.bf16.mxu0 0
    %1041 = vmatpush1.bf16.msra.mxu0 0
    %1042 = vmatprep.subr.bf16.mxu0 0
    %1043 = vmatpush1.bf16.msra.mxu0 0
    %1044 = vmatprep.subr.bf16.mxu0 0
    %1045 = vmatpush1.bf16.msra.mxu0 0
    %1046 = vmatprep.mubr.bf16.mxu0 0
    %1047 = vmatmul.mubr.bf16.gmra.mrb[0].mxu0 %v1009
    %v1048 = vpop.f32.mrb[0].mxu0
    %v1049 = vadd.f32 0.0, %v1048
    %v1050 = vpop.f32.mrb[0].mxu0
    %v1051 = vpop.f32.mrb[0].mxu0
    %v1052 = vpop.f32.mrb[0].mxu0
    %1053 = vdwg.mxu0
    %1054 = vrot.lane.b32.xlu0 %v727, 104
    %v1055 = vpop.permute.xlu0 %1054
    %1056 = vrot.lane.b32.xlu0 %v728, 104
    %v1057 = vpop.permute.xlu0 %1056
    %v1059 = vsel %vm272, %v1055, 0
    %v1062 = vsel %vm272, %v1057, 0
    %1064 = vmatprep.subr.bf16.mxu0 0
    %1065 = vmatpush1.bf16.xpose.msra.mxu0 %v1062
    %1066 = vmatprep.subr.bf16.mxu0 0
    %1067 = vmatpush1.bf16.xpose.msra.mxu0 0
    %1068 = vmatprep.subr.bf16.mxu0 0
    %1069 = vmatpush1.bf16.xpose.msra.mxu0 0
    %1070 = vmatprep.subr.bf16.mxu0 0
    %1071 = vmatpush1.bf16.xpose.msra.mxu0 0
    %1072 = vmatprep.subr.bf16.mxu0 0
    %1073 = vmatpush1.bf16.xpose.msra.mxu0 0
    %1074 = vmatprep.subr.bf16.mxu0 0
    %1075 = vmatpush1.bf16.xpose.msra.mxu0 0
    %1076 = vmatprep.subr.bf16.mxu0 0
    %1077 = vmatpush1.bf16.xpose.msra.mxu0 0
    %1078 = vmatprep.subr.bf16.mxu0 0
    %1079 = vmatpush1.bf16.xpose.msra.mxu0 0
    %1080 = vmatprep.subr.bf16.mxu0 0
    %1081 = vmatpush1.bf16.xpose.msra.mxu0 0
    %1082 = vmatprep.subr.bf16.mxu0 0
    %1083 = vmatpush1.bf16.xpose.msra.mxu0 0
    %1084 = vmatprep.subr.bf16.mxu0 0
    %1085 = vmatpush1.bf16.xpose.msra.mxu0 0
    %1086 = vmatprep.subr.bf16.mxu0 0
    %1087 = vmatpush1.bf16.xpose.msra.mxu0 0
    %1088 = vmatprep.subr.bf16.mxu0 0
    %1089 = vmatpush1.bf16.xpose.msra.mxu0 0
    %1090 = vmatprep.subr.bf16.mxu0 0
    %1091 = vmatpush1.bf16.xpose.msra.mxu0 0
    %1092 = vmatprep.subr.bf16.mxu0 0
    %1093 = vmatpush1.bf16.xpose.msra.mxu0 0
    %1094 = vmatprep.subr.bf16.mxu0 0
    %1095 = vmatpush1.bf16.xpose.msra.mxu0 0
    %1096 = vmatprep.mubr.bf16.mxu0 0
    %1097 = vmatmul.mubr.bf16.gmra.mrb[0].mxu0 %v1059
    %v1098 = vpop.f32.mrb[0].mxu0
    %v1099 = vadd.f32 0.0, %v1098
    %v1100 = vpop.f32.mrb[0].mxu0
    %v1101 = vpop.f32.mrb[0].mxu0
    %v1102 = vpop.f32.mrb[0].mxu0
    %1103 = vdwg.mxu0
    %v1104 = vsel %vm272, %v1099, -inf
    %1105 = vmax.xlane.f32.xlu0 %v1104
    %v1106 = vpop.xlane.xlu0 %1105
    %v1107 = vsub.f32 %v1099, %v1106
    %v1108 = vmul.f32 %v1107, 1.442695
    %v1109 = vpow.pop %v1108
    %v1110 = vsel %vm272, %v1109, 0.0
    %1111 = vadd.xlane.f32.xlu0 %v1110
    %v1112 = vpop.xlane.xlu0 %1111
    %v1113 = vrcp.pop %v1112
    %v1114 = vmul.f32 %v1109, %v1113
    %v1115 = vpack.c.bf16 %v1114, %v1114
    %1116 = vrot.lane.b32.xlu0 %v787, 104
    %v1117 = vpop.permute.xlu0 %1116
    %v1119 = vsel %vm272, %v1115, 0
    %v1122 = vsel %vm334, %v1117, 0
    %1124 = vmatprep.subr.bf16.mxu0 0
    %1125 = vmatpush1.bf16.msra.mxu0 %v1122
    %1126 = vmatprep.subr.bf16.mxu0 0
    %1127 = vmatpush1.bf16.msra.mxu0 0
    %1128 = vmatprep.subr.bf16.mxu0 0
    %1129 = vmatpush1.bf16.msra.mxu0 0
    %1130 = vmatprep.subr.bf16.mxu0 0
    %1131 = vmatpush1.bf16.msra.mxu0 0
    %1132 = vmatprep.subr.bf16.mxu0 0
    %1133 = vmatpush1.bf16.msra.mxu0 0
    %1134 = vmatprep.subr.bf16.mxu0 0
    %1135 = vmatpush1.bf16.msra.mxu0 0
    %1136 = vmatprep.subr.bf16.mxu0 0
    %1137 = vmatpush1.bf16.msra.mxu0 0
    %1138 = vmatprep.subr.bf16.mxu0 0
    %1139 = vmatpush1.bf16.msra.mxu0 0
    %1140 = vmatprep.subr.bf16.mxu0 0
    %1141 = vmatpush1.bf16.msra.mxu0 0
    %1142 = vmatprep.subr.bf16.mxu0 0
    %1143 = vmatpush1.bf16.msra.mxu0 0
    %1144 = vmatprep.subr.bf16.mxu0 0
    %1145 = vmatpush1.bf16.msra.mxu0 0
    %1146 = vmatprep.subr.bf16.mxu0 0
    %1147 = vmatpush1.bf16.msra.mxu0 0
    %1148 = vmatprep.subr.bf16.mxu0 0
    %1149 = vmatpush1.bf16.msra.mxu0 0
    %1150 = vmatprep.subr.bf16.mxu0 0
    %1151 = vmatpush1.bf16.msra.mxu0 0
    %1152 = vmatprep.subr.bf16.mxu0 0
    %1153 = vmatpush1.bf16.msra.mxu0 0
    %1154 = vmatprep.subr.bf16.mxu0 0
    %1155 = vmatpush1.bf16.msra.mxu0 0
    %1156 = vmatprep.mubr.bf16.mxu0 0
    %1157 = vmatmul.mubr.bf16.gmra.mrb[0].mxu0 %v1119
    %v1158 = vpop.f32.mrb[0].mxu0
    %v1159 = vadd.f32 0.0, %v1158
    %v1160 = vpop.f32.mrb[0].mxu0
    %v1161 = vpop.f32.mrb[0].mxu0
    %v1162 = vpop.f32.mrb[0].mxu0
    %1163 = vdwg.mxu0
    %1165 = vrot.lane.b32.xlu0 %v939, 8
    %v1166 = vpop.permute.xlu0 %1165
    %1169 = vrot.lane.b32.xlu0 %v1049, 16
    %v1170 = vpop.permute.xlu0 %1169
    %1173 = vrot.lane.b32.xlu0 %v1159, 24
    %v1174 = vpop.permute.xlu0 %1173
    %v1176 = vsel %vm272, %v829, %v1166
    %v1177 = vsel %vm134, %v1176, %v1170
    %v1178 = vsel %vm725, %v1177, %v1174
    %v1179 = vpack.c.bf16 %v1178, %v726
    %vm1180 = vcmask 261120
    %v1182 = vsel %vm1180, %v1179, 0
    %1184 = vmatprep.subr.bf16.mxu0 0
    %1185 = vmatpush1.bf16.msra.mxu0 %v123
    %1186 = vmatprep.subr.bf16.mxu0 0
    %1187 = vmatpush1.bf16.msra.mxu0 %v124
    %1188 = vmatprep.subr.bf16.mxu0 0
    %1189 = vmatpush1.bf16.msra.mxu0 0
    %1190 = vmatprep.subr.bf16.mxu0 0
    %1191 = vmatpush1.bf16.msra.mxu0 0
    %1192 = vmatprep.subr.bf16.mxu0 0
    %1193 = vmatpush1.bf16.msra.mxu0 0
    %1194 = vmatprep.subr.bf16.mxu0 0
    %1195 = vmatpush1.bf16.msra.mxu0 0
    %1196 = vmatprep.subr.bf16.mxu0 0
    %1197 = vmatpush1.bf16.msra.mxu0 0
    %1198 = vmatprep.subr.bf16.mxu0 0
    %1199 = vmatpush1.bf16.msra.mxu0 0
    %1200 = vmatprep.subr.bf16.mxu0 0
    %1201 = vmatpush1.bf16.msra.mxu0 0
    %1202 = vmatprep.subr.bf16.mxu0 0
    %1203 = vmatpush1.bf16.msra.mxu0 0
    %1204 = vmatprep.subr.bf16.mxu0 0
    %1205 = vmatpush1.bf16.msra.mxu0 0
    %1206 = vmatprep.subr.bf16.mxu0 0
    %1207 = vmatpush1.bf16.msra.mxu0 0
    %1208 = vmatprep.subr.bf16.mxu0 0
    %1209 = vmatpush1.bf16.msra.mxu0 0
    %1210 = vmatprep.subr.bf16.mxu0 0
    %1211 = vmatpush1.bf16.msra.mxu0 0
    %1212 = vmatprep.subr.bf16.mxu0 0
    %1213 = vmatpush1.bf16.msra.mxu0 0
    %1214 = vmatprep.subr.bf16.mxu0 0
    %1215 = vmatpush1.bf16.msra.mxu0 0
    %1216 = vmatprep.mubr.bf16.mxu0 0
    %1217 = vmatmul.mubr.bf16.gmra.mrb[0].mxu0 %v1182
    %v1218 = vpop.f32.mrb[0].mxu0
    %v1219 = vadd.f32 0.0, %v1218
    %v1220 = vpop.f32.mrb[0].mxu0
    %v1221 = vpop.f32.mrb[0].mxu0
    %v1222 = vadd.f32 0.0, %v1221
    %v1223 = vpop.f32.mrb[0].mxu0
    %1224 = vdwg.mxu0
    %1225 = vst.msk [vmem:[#allocation13] sm:$0xff] %vm1180, %v1219
    %1226 = vst.msk [vmem:[#allocation13 + $0x8] sm:$0xff] %vm1180, %v1222
    // Predicated region
    $region54: #{tpu_custom_call.1} parent=1 // pred_check
      _
    $region55: #{tpu_custom_call.1} parent=1 // pred_check_branch
      %1228 = sbr.rel (0) target = $region57
    $region56: #{tpu_custom_call.1} parent=1 // pred_region
      %s1230 = ssub.s32 256, 256
      %1231 = vsyncadd [#allocation4], %s1230
      %s1232 = sshll.u32 [#allocation13], 4
      %s1233 = int_to_ptr.vmem [resolvable:$true] %s1232
      %1238 = dma.vmem_to_hbm [thread:$0]  %s1233, 256, %s7, [#allocation4], 128, 128, 8
    $region57: #{tpu_custom_call.1} parent=1 // pred_fallthru
      _
    // Predicated region
    $region58: #{tpu_custom_call.1} parent=1 // pred_check
      _
    $region59: #{tpu_custom_call.1} parent=1 // pred_check_branch
      %1240 = sbr.rel (0) target = $region61
    $region60: #{tpu_custom_call.1} parent=1 // pred_region
      %1241 = dma.done [#allocation4], 256
    $region61: #{tpu_custom_call.1} parent=1 // pred_fallthru
      _
    %1242 = vsyncpa [#allocation3], 1
    %1243 = vsyncpa [#allocation6], 1
    %1244 = vsyncpa [#allocation9], 1
    %1245 = vsyncpa [#allocation12], 1
    %1246 = vsyncpa [#allocation4], 1

</llo_original>
